<compile_context>
chip_gen: v5e
topology: v5e:2x2
jax: 0.10.0
libtpu: 0.0.40
codegen_flags: <defaults>
</compile_context>

<pallas_src>
import functools
import math

import jax
import jax.numpy as jnp
import numpy as np
from jax.experimental import pallas as pl
from jax.experimental.pallas import tpu as pltpu

LANE = 128


def _round_up(n, m):
    return ((n + m - 1) // m) * m


# ----------------------------------------------------------------------------
# The fused kernel
# ----------------------------------------------------------------------------
def lenet_fused_kernel(p1_ref, wc1_ref, bc1_ref, sel_ref, wc2_ref, bc2_ref,
                       wf1_ref, bf1_ref, wf2_ref, bf2_ref, wf3_ref, bf3_ref,
                       out_ref):
    """Whole LeNet300100 forward on VMEM-resident tiles.

    p1_ref  : (4*M1P, 16)  conv1 im2col patches, 4 pool corners stacked on M
    wc1_ref : (16, 32)     conv1 weights (rows = 3x3 offsets, 9 real + 7 zero)
    sel_ref : (9*R2, M1P)  0/1 row-selection matrices (one per conv2 offset)
    wc2_ref : (9*32, 64)   conv2 weights, real input channels only
    wf1_ref : (4*64, H1)   fc1 weights grouped by pooled spatial position
    wf2_ref : (H1, H2)     fc2 weights;  wf3_ref : (H2, 128) fc3 (N padded)
    b*_ref  : f32 bias rows;  out_ref : (8, 128) f32 lane-dense logits block
    """
    cdtype = wc1_ref.dtype                    # MXU input dtype (f32 or bf16)
    noff = 9                                  # 3x3 kernel offsets
    m1p = p1_ref.shape[0] // 4                # rows per conv1 pool corner
    r2 = sel_ref.shape[0] // noff             # conv2 GEMM rows (4*4*8 = 128)
    cin2 = wc2_ref.shape[0] // noff           # conv2 real input channels (32)
    c2 = wc2_ref.shape[1]                     # conv2 output channels (64)
    nspat = wf1_ref.shape[0] // c2            # pooled-2 spatial positions (4)
    rows_c = r2 // 4                          # conv2 rows per pool corner (32)
    rows_s = rows_c // nspat                  # rows per spatial position (8)

    # --- conv1 + bias + ReLU + 2x2 maxpool (4-corner max, fused epilogue) ---
    acc1 = jnp.dot(p1_ref[...], wc1_ref[...],
                   preferred_element_type=jnp.float32)            # (4*M1P, 32)
    mx1 = jnp.maximum(jnp.maximum(acc1[0:m1p], acc1[m1p:2 * m1p]),
                      jnp.maximum(acc1[2 * m1p:3 * m1p],
                                  acc1[3 * m1p:4 * m1p]))
    h1 = jnp.maximum(mx1 + bc1_ref[...], 0.0).astype(cdtype)      # (M1P, 32)

    # --- conv2 + bias + ReLU + 2x2 maxpool ---
    # Direct conv as a sum over the 9 offsets: the spatial gather is an
    # in-kernel 0/1 selection matmul, so the conv1 output never leaves VMEM
    # and only the 32 real input channels are contracted (K = 288).
    acc2 = jnp.zeros((r2, c2), jnp.float32)
    for o in range(noff):
        sel = sel_ref[o * r2:(o + 1) * r2, :]                     # (R2, M1P)
        t = jnp.dot(sel, h1, preferred_element_type=jnp.float32)  # exact gather
        acc2 = acc2 + jnp.dot(t.astype(cdtype),
                              wc2_ref[o * cin2:(o + 1) * cin2, :],
                              preferred_element_type=jnp.float32)
    mx2 = jnp.maximum(
        jnp.maximum(acc2[0:rows_c], acc2[rows_c:2 * rows_c]),
        jnp.maximum(acc2[2 * rows_c:3 * rows_c], acc2[3 * rows_c:4 * rows_c]))
    h2 = jnp.maximum(mx2 + bc2_ref[...], 0.0)                     # (32, 64) f32

    # --- fc1: sum over the pooled spatial positions (torch's CHW flatten is
    #     folded into wf1's row blocks at prep time), then fc2, fc3 ---
    f = jnp.zeros((rows_s, wf1_ref.shape[1]), jnp.float32)
    for s in range(nspat):
        f = f + jnp.dot(h2[s * rows_s:(s + 1) * rows_s, :].astype(cdtype),
                        wf1_ref[s * c2:(s + 1) * c2, :],
                        preferred_element_type=jnp.float32)
    f = jnp.maximum(f + bf1_ref[...], 0.0).astype(cdtype)

    f = jnp.dot(f, wf2_ref[...], preferred_element_type=jnp.float32)
    f = jnp.maximum(f + bf2_ref[...], 0.0).astype(cdtype)

    f = jnp.dot(f, wf3_ref[...], preferred_element_type=jnp.float32)
    out_ref[...] = (f + bf3_ref[...]).astype(out_ref.dtype)


# ----------------------------------------------------------------------------
# Pallas wrapper (one call, whole-array blocks; everything fits VMEM easily)
# ----------------------------------------------------------------------------
def _full_spec(shape):
    n = len(shape)
    return pl.BlockSpec(shape, lambda i: (0,) * n)


def lenet_forward_pallas(pp, x_nchw, *, out_features=10):
    """Plain-JAX im2col of the raw input, then a single fused pallas_call."""
    batch = x_nchw.shape[0]
    in_dim = x_nchw.shape[2]
    ph = (in_dim - 2) // 2
    m1p = _round_up(batch * ph * ph, 8)
    cdtype = pp["wc1"].dtype

    p1 = conv1_corner_patches(x_nchw[:, 0], m1p, cdtype)

    args = (p1, pp["wc1"], pp["bc1"], pp["sel"], pp["wc2"], pp["bc2"],
            pp["wf1"], pp["bf1"], pp["wf2"], pp["bf2"], pp["wf3"], pp["bf3"])
    out_shape = (8, pp["wf3"].shape[1])          # lane-dense (8, 128) block
    out = pl.pallas_call(
        lenet_fused_kernel,
        out_shape=jax.ShapeDtypeStruct(out_shape, jnp.float32),
        grid=(1,),
        in_specs=[_full_spec(a.shape) for a in args],
        out_specs=_full_spec(out_shape),
        compiler_params=pltpu.CompilerParams(
            dimension_semantics=("arbitrary",)),
    )(*args)
    return out[:batch, :out_features]


# ----------------------------------------------------------------------------
# Layout plumbing (plain JAX / numpy): input im2col + conv2 selection matrices
# ----------------------------------------------------------------------------
def conv1_corner_patches(x_img, m1p, dtype):
    """x_img: (B, H, W) single-channel input -> (4*m1p, 16) im2col patches,
    the four 2x2-pool corner blocks stacked along M (K padded 9->16, rows
    padded to the sublane-aligned m1p)."""
    batch, height, _ = x_img.shape
    ph = (height - 2) // 2                   # conv1-pooled spatial extent
    blocks = []
    for pi in range(2):
        for pj in range(2):
            cols = [x_img[:, pi + di: pi + di + 2 * ph - 1: 2,
                          pj + dj: pj + dj + 2 * ph - 1: 2]
                    for di in range(3) for dj in range(3)]
            p = jnp.stack(cols, axis=-1).reshape(batch * ph * ph, 9)
            p = jnp.pad(p, ((0, m1p - batch * ph * ph), (0, 16 - 9)))
            blocks.append(p)
    return jnp.concatenate(blocks, axis=0).astype(dtype)


def build_conv2_selection(batch, ph, fd, dtype):
    """0/1 matrices (one per 3x3 offset) gathering conv2's input rows from the
    flattened (b, i, j) conv1-pooled output, for every pool-2 corner, pooled
    output position and (sublane-padded to 8) batch row.  Padded rows select
    nothing; conv1's padded rows are never selected."""
    assert batch <= 8, "conv2 row blocks pad the batch to 8 sublanes"
    m1p = _round_up(batch * ph * ph, 8)
    nspat = fd * fd
    r2 = 4 * nspat * 8
    sel = np.zeros((9, r2, m1p), np.float32)
    corners = ((0, 0), (0, 1), (1, 0), (1, 1))
    for o, (dr, dc) in enumerate((a, b) for a in range(3) for b in range(3)):
        for ci, (pr, pc) in enumerate(corners):
            for si in range(fd):
                for sj in range(fd):
                    for b in range(batch):
                        row = ci * nspat * 8 + (si * fd + sj) * 8 + b
                        col = (b * ph * ph + (2 * si + pr + dr) * ph
                               + (2 * sj + pc + dc))
                        sel[o, row, col] = 1.0
    return jnp.asarray(sel.reshape(9 * r2, m1p), dtype)


# ----------------------------------------------------------------------------
# Parameters
# ----------------------------------------------------------------------------
def _uniform(key, shape, bound):
    return jax.random.uniform(key, shape, jnp.float32, -bound, bound)


def init_params(key, in_dim, hidden1, hidden2, out_features):
    final_dim = ((in_dim - 2) // 2 - 2) // 2
    fc_in = 64 * final_dim * final_dim
    ks = jax.random.split(key, 10)
    params = {
        # nn.Conv2d defaults: uniform(+-1/sqrt(fan_in)), fan_in = Cin*kh*kw
        "conv1_w": _uniform(ks[0], (32, 1, 3, 3), 1.0 / math.sqrt(1 * 9)),
        "conv1_b": _uniform(ks[1], (32,), 1.0 / math.sqrt(1 * 9)),
        "conv2_w": _uniform(ks[2], (64, 32, 3, 3), 1.0 / math.sqrt(32 * 9)),
        "conv2_b": _uniform(ks[3], (64,), 1.0 / math.sqrt(32 * 9)),
        # kaiming_uniform_(mode='fan_in', relu); torch fan_in = dim 1
        "weight1": _uniform(ks[4], (fc_in, hidden1), math.sqrt(6.0 / hidden1)),
        "bias1":   _uniform(ks[5], (1, hidden1), math.sqrt(6.0 / hidden1)),
        "weight2": _uniform(ks[6], (hidden1, hidden2), math.sqrt(6.0 / hidden2)),
        "bias2":   _uniform(ks[7], (1, hidden2), math.sqrt(6.0 / hidden2)),
        "weight3": _uniform(ks[8], (hidden2, out_features),
                            math.sqrt(6.0 / out_features)),
        "bias3":   _uniform(ks[9], (1, out_features),
                            math.sqrt(6.0 / out_features)),
    }
    return params, fc_in, final_dim


def prepare_pallas_params(params, batch, in_dim, hidden1, hidden2,
                          out_features, dtype=jnp.float32):
    """One-time re-layout of the parameters for the fused kernel.  `dtype` is
    the MXU input dtype (f32 exact path or bf16 fast path); biases stay f32
    because all epilogue math (bias add / max / ReLU) is done in f32."""
    ph = (in_dim - 2) // 2                   # conv1-pooled spatial (7)
    fd = (ph - 2) // 2                       # conv2-pooled spatial (2)
    nop = _round_up(out_features, LANE)

    # conv1: (Cout,Cin=1,3,3) -> rows = 3x3 offsets (9 real + 7 zero), cols Cout
    wc1 = params["conv1_w"].transpose(2, 3, 1, 0).reshape(9, 32)
    wc1 = jnp.pad(wc1, ((0, 16 - 9), (0, 0))).astype(dtype)
    bc1 = params["conv1_b"].reshape(1, 32).astype(jnp.float32)

    # conv2: rows = (offset, cin) over the 32 REAL input channels only (K=288)
    wc2 = params["conv2_w"].transpose(2, 3, 1, 0).reshape(9 * 32, 64)
    wc2 = wc2.astype(dtype)
    bc2 = params["conv2_b"].reshape(1, 64).astype(jnp.float32)

    sel = build_conv2_selection(batch, ph, fd, dtype)

    # fc1: regroup torch's CHW-flatten rows (c*fd*fd + s) into per-spatial
    # blocks (s*64 + c) so the kernel sums fd*fd small GEMMs over real rows.
    wf1 = params["weight1"].reshape(64, fd * fd, hidden1).transpose(1, 0, 2)
    wf1 = wf1.reshape(fd * fd * 64, hidden1).astype(dtype)
    bf1 = params["bias1"].astype(jnp.float32)

    wf2 = params["weight2"].astype(dtype)
    bf2 = params["bias2"].astype(jnp.float32)
    wf3 = jnp.pad(params["weight3"],
                  ((0, 0), (0, nop - out_features))).astype(dtype)
    bf3 = jnp.pad(params["bias3"],
                  ((0, 0), (0, nop - out_features))).astype(jnp.float32)

    return {"wc1": wc1, "bc1": bc1, "sel": sel, "wc2": wc2, "bc2": bc2,
            "wf1": wf1, "bf1": bf1, "wf2": wf2, "bf2": bf2,
            "wf3": wf3, "bf3": bf3}


# ----------------------------------------------------------------------------
# Pure-JAX reference (exact PyTorch semantics: NCHW, CHW flatten)
# ----------------------------------------------------------------------------
def _ref_forward(params, x, fc_in):
    def conv_relu(x, w, b):
        y = jax.lax.conv_general_dilated(
            x, w, (1, 1), "VALID",
            dimension_numbers=("NCHW", "OIHW", "NCHW"))
        return jnp.maximum(y + b.reshape(1, -1, 1, 1), 0.0)

    def pool(x):
        _, _, h, w = x.shape
        hh, wh = h // 2, w // 2
        x = x[:, :, :2 * hh, :2 * wh]
        return jnp.maximum(
            jnp.maximum(x[:, :, 0::2, 0::2], x[:, :, 0::2, 1::2]),
            jnp.maximum(x[:, :, 1::2, 0::2], x[:, :, 1::2, 1::2]))

    x = pool(conv_relu(x, params["conv1_w"], params["conv1_b"]))
    x = pool(conv_relu(x, params["conv2_w"], params["conv2_b"]))
    x = x.reshape(-1, fc_in)
    x = jnp.maximum(x @ params["weight1"] + params["bias1"], 0.0)
    x = jnp.maximum(x @ params["weight2"] + params["bias2"], 0.0)
    return x @ params["weight3"] + params["bias3"]


# ----------------------------------------------------------------------------
if __name__ == "__main__":
    B, in_dim = 2, 16                  # final_dim = ((16-2)//2 - 2)//2 = 2
    hidden1, hidden2, out_features = 64, 32, 10

    key = jax.random.PRNGKey(0)
    pkey, xkey = jax.random.split(key)
    params, fc_in, final_dim = init_params(pkey, in_dim, hidden1, hidden2,
                                           out_features)
    x = jax.random.normal(xkey, (B, 1, in_dim, in_dim), jnp.float32)  # NCHW
    ref = _ref_forward(params, x, fc_in)

    fwd = jax.jit(functools.partial(lenet_forward_pallas,
                                    out_features=out_features))

    # Exact-structure check: f32 MXU inputs, tight tolerance.
    pp32 = prepare_pallas_params(params, B, in_dim, hidden1, hidden2,
                                 out_features, dtype=jnp.float32)
    out32 = jax.block_until_ready(fwd(pp32, x))
    assert out32.shape == (B, out_features)
    err32 = float(jnp.max(jnp.abs(out32 - ref)))
    assert jnp.allclose(out32, ref, atol=2e-3, rtol=2e-3), err32

    # Fast path (per perf review): bf16 MXU inputs, f32 accumulate/epilogue.
    # bf16 input rounding through 5 matmul layers -> relaxed tolerance.
    ppbf = prepare_pallas_params(params, B, in_dim, hidden1, hidden2,
                                 out_features, dtype=jnp.bfloat16)
    outbf = jax.block_until_ready(fwd(ppbf, x))
    errbf = float(jnp.max(jnp.abs(outbf - ref)))
    assert jnp.allclose(outbf, ref, atol=1e-1, rtol=1e-1), errbf

    print("KERNEL_OK")
</pallas_src>

<mosaic_0001>
module attributes {stable_mosaic.version = 11 : i64} {
  func.func @lenet_fused_kernel(%arg0: i32, %arg1: memref<416x16xf32, #tpu.memory_space<vmem>>, %arg2: memref<16x32xf32, #tpu.memory_space<vmem>>, %arg3: memref<1x32xf32, #tpu.memory_space<vmem>>, %arg4: memref<1152x104xf32, #tpu.memory_space<vmem>>, %arg5: memref<288x64xf32, #tpu.memory_space<vmem>>, %arg6: memref<1x64xf32, #tpu.memory_space<vmem>>, %arg7: memref<256x64xf32, #tpu.memory_space<vmem>>, %arg8: memref<1x64xf32, #tpu.memory_space<vmem>>, %arg9: memref<64x32xf32, #tpu.memory_space<vmem>>, %arg10: memref<1x32xf32, #tpu.memory_space<vmem>>, %arg11: memref<32x128xf32, #tpu.memory_space<vmem>>, %arg12: memref<1x128xf32, #tpu.memory_space<vmem>>, %arg13: memref<8x128xf32, #tpu.memory_space<vmem>>) attributes {dimension_semantics = [#tpu.dimension_semantics<arbitrary>], iteration_bounds = array<i64: 1>, scalar_prefetch = 0 : i64, scratch_operands = 0 : i64, tpu.core_type = #tpu.core_type<tc>, window_params = [{pipeline_mode = #tpu.pipeline_mode<synchronous>, transform_indices = @transform_0, window_bounds = array<i64: 416, 16>}, {pipeline_mode = #tpu.pipeline_mode<synchronous>, transform_indices = @transform_1, window_bounds = array<i64: 16, 32>}, {pipeline_mode = #tpu.pipeline_mode<synchronous>, transform_indices = @transform_2, window_bounds = array<i64: 1, 32>}, {pipeline_mode = #tpu.pipeline_mode<synchronous>, transform_indices = @transform_3, window_bounds = array<i64: 1152, 104>}, {pipeline_mode = #tpu.pipeline_mode<synchronous>, transform_indices = @transform_4, window_bounds = array<i64: 288, 64>}, {pipeline_mode = #tpu.pipeline_mode<synchronous>, transform_indices = @transform_5, window_bounds = array<i64: 1, 64>}, {pipeline_mode = #tpu.pipeline_mode<synchronous>, transform_indices = @transform_6, window_bounds = array<i64: 256, 64>}, {pipeline_mode = #tpu.pipeline_mode<synchronous>, transform_indices = @transform_7, window_bounds = array<i64: 1, 64>}, {pipeline_mode = #tpu.pipeline_mode<synchronous>, transform_indices = @transform_8, window_bounds = array<i64: 64, 32>}, {pipeline_mode = #tpu.pipeline_mode<synchronous>, transform_indices = @transform_9, window_bounds = array<i64: 1, 32>}, {pipeline_mode = #tpu.pipeline_mode<synchronous>, transform_indices = @transform_10, window_bounds = array<i64: 32, 128>}, {pipeline_mode = #tpu.pipeline_mode<synchronous>, transform_indices = @transform_11, window_bounds = array<i64: 1, 128>}, {pipeline_mode = #tpu.pipeline_mode<synchronous>, transform_indices = @transform_12, window_bounds = array<i64: 8, 128>}]} {
    %c0 = arith.constant 0 : index
    %c0_0 = arith.constant 0 : index
    %0 = vector.load %arg1[%c0, %c0_0] : memref<416x16xf32, #tpu.memory_space<vmem>>, vector<416x16xf32>
    %c0_1 = arith.constant 0 : index
    %c0_2 = arith.constant 0 : index
    %1 = vector.load %arg2[%c0_1, %c0_2] : memref<16x32xf32, #tpu.memory_space<vmem>>, vector<16x32xf32>
    %cst = arith.constant dense<0.000000e+00> : vector<416x32xf32>
    %2 = tpu.matmul %0, %1, %cst {dimension_numbers = #tpu.dot_dimension_numbers<[1], [0], [0], [1], [0, 0, 1, 1], [], []>} : vector<416x16xf32>, vector<16x32xf32>, vector<416x32xf32> -> vector<416x32xf32>
    %3 = vector.extract_strided_slice %2 {offsets = [0, 0], sizes = [104, 32], strides = [1, 1]} : vector<416x32xf32> to vector<104x32xf32>
    %4 = vector.extract_strided_slice %2 {offsets = [104, 0], sizes = [104, 32], strides = [1, 1]} : vector<416x32xf32> to vector<104x32xf32>
    %5 = arith.maximumf %3, %4 : vector<104x32xf32>
    %6 = vector.extract_strided_slice %2 {offsets = [208, 0], sizes = [104, 32], strides = [1, 1]} : vector<416x32xf32> to vector<104x32xf32>
    %7 = vector.extract_strided_slice %2 {offsets = [312, 0], sizes = [104, 32], strides = [1, 1]} : vector<416x32xf32> to vector<104x32xf32>
    %8 = arith.maximumf %6, %7 : vector<104x32xf32>
    %9 = arith.maximumf %5, %8 : vector<104x32xf32>
    %c0_3 = arith.constant 0 : index
    %c0_4 = arith.constant 0 : index
    %10 = vector.load %arg3[%c0_3, %c0_4] : memref<1x32xf32, #tpu.memory_space<vmem>>, vector<1x32xf32>
    %11 = vector.broadcast %10 : vector<1x32xf32> to vector<104x32xf32>
    %12 = arith.addf %9, %11 : vector<104x32xf32>
    %cst_5 = arith.constant 0.000000e+00 : f32
    %13 = vector.broadcast %cst_5 : f32 to vector<104x32xf32>
    %14 = arith.maximumf %12, %13 : vector<104x32xf32>
    %cst_6 = arith.constant 0.000000e+00 : f32
    %15 = vector.broadcast %cst_6 : f32 to vector<128x64xf32>
    %c0_7 = arith.constant 0 : index
    %c0_8 = arith.constant 0 : index
    %16 = vector.load %arg4[%c0_7, %c0_8] : memref<1152x104xf32, #tpu.memory_space<vmem>>, vector<128x104xf32>
    %cst_9 = arith.constant dense<0.000000e+00> : vector<128x32xf32>
    %17 = tpu.matmul %16, %14, %cst_9 {dimension_numbers = #tpu.dot_dimension_numbers<[1], [0], [0], [1], [0, 0, 1, 1], [], []>} : vector<128x104xf32>, vector<104x32xf32>, vector<128x32xf32> -> vector<128x32xf32>
    %c0_10 = arith.constant 0 : index
    %c0_11 = arith.constant 0 : index
    %18 = vector.load %arg5[%c0_10, %c0_11] : memref<288x64xf32, #tpu.memory_space<vmem>>, vector<32x64xf32>
    %cst_12 = arith.constant dense<0.000000e+00> : vector<128x64xf32>
    %19 = tpu.matmul %17, %18, %cst_12 {dimension_numbers = #tpu.dot_dimension_numbers<[1], [0], [0], [1], [0, 0, 1, 1], [], []>} : vector<128x32xf32>, vector<32x64xf32>, vector<128x64xf32> -> vector<128x64xf32>
    %20 = arith.addf %15, %19 : vector<128x64xf32>
    %c128 = arith.constant 128 : index
    %c0_13 = arith.constant 0 : index
    %21 = vector.load %arg4[%c128, %c0_13] : memref<1152x104xf32, #tpu.memory_space<vmem>>, vector<128x104xf32>
    %cst_14 = arith.constant dense<0.000000e+00> : vector<128x32xf32>
    %22 = tpu.matmul %21, %14, %cst_14 {dimension_numbers = #tpu.dot_dimension_numbers<[1], [0], [0], [1], [0, 0, 1, 1], [], []>} : vector<128x104xf32>, vector<104x32xf32>, vector<128x32xf32> -> vector<128x32xf32>
    %c32 = arith.constant 32 : index
    %c0_15 = arith.constant 0 : index
    %23 = vector.load %arg5[%c32, %c0_15] : memref<288x64xf32, #tpu.memory_space<vmem>>, vector<32x64xf32>
    %cst_16 = arith.constant dense<0.000000e+00> : vector<128x64xf32>
    %24 = tpu.matmul %22, %23, %cst_16 {dimension_numbers = #tpu.dot_dimension_numbers<[1], [0], [0], [1], [0, 0, 1, 1], [], []>} : vector<128x32xf32>, vector<32x64xf32>, vector<128x64xf32> -> vector<128x64xf32>
    %25 = arith.addf %20, %24 : vector<128x64xf32>
    %c256 = arith.constant 256 : index
    %c0_17 = arith.constant 0 : index
    %26 = vector.load %arg4[%c256, %c0_17] : memref<1152x104xf32, #tpu.memory_space<vmem>>, vector<128x104xf32>
    %cst_18 = arith.constant dense<0.000000e+00> : vector<128x32xf32>
    %27 = tpu.matmul %26, %14, %cst_18 {dimension_numbers = #tpu.dot_dimension_numbers<[1], [0], [0], [1], [0, 0, 1, 1], [], []>} : vector<128x104xf32>, vector<104x32xf32>, vector<128x32xf32> -> vector<128x32xf32>
    %c64 = arith.constant 64 : index
    %c0_19 = arith.constant 0 : index
    %28 = vector.load %arg5[%c64, %c0_19] : memref<288x64xf32, #tpu.memory_space<vmem>>, vector<32x64xf32>
    %cst_20 = arith.constant dense<0.000000e+00> : vector<128x64xf32>
    %29 = tpu.matmul %27, %28, %cst_20 {dimension_numbers = #tpu.dot_dimension_numbers<[1], [0], [0], [1], [0, 0, 1, 1], [], []>} : vector<128x32xf32>, vector<32x64xf32>, vector<128x64xf32> -> vector<128x64xf32>
    %30 = arith.addf %25, %29 : vector<128x64xf32>
    %c384 = arith.constant 384 : index
    %c0_21 = arith.constant 0 : index
    %31 = vector.load %arg4[%c384, %c0_21] : memref<1152x104xf32, #tpu.memory_space<vmem>>, vector<128x104xf32>
    %cst_22 = arith.constant dense<0.000000e+00> : vector<128x32xf32>
    %32 = tpu.matmul %31, %14, %cst_22 {dimension_numbers = #tpu.dot_dimension_numbers<[1], [0], [0], [1], [0, 0, 1, 1], [], []>} : vector<128x104xf32>, vector<104x32xf32>, vector<128x32xf32> -> vector<128x32xf32>
    %c96 = arith.constant 96 : index
    %c0_23 = arith.constant 0 : index
    %33 = vector.load %arg5[%c96, %c0_23] : memref<288x64xf32, #tpu.memory_space<vmem>>, vector<32x64xf32>
    %cst_24 = arith.constant dense<0.000000e+00> : vector<128x64xf32>
    %34 = tpu.matmul %32, %33, %cst_24 {dimension_numbers = #tpu.dot_dimension_numbers<[1], [0], [0], [1], [0, 0, 1, 1], [], []>} : vector<128x32xf32>, vector<32x64xf32>, vector<128x64xf32> -> vector<128x64xf32>
    %35 = arith.addf %30, %34 : vector<128x64xf32>
    %c512 = arith.constant 512 : index
    %c0_25 = arith.constant 0 : index
    %36 = vector.load %arg4[%c512, %c0_25] : memref<1152x104xf32, #tpu.memory_space<vmem>>, vector<128x104xf32>
    %cst_26 = arith.constant dense<0.000000e+00> : vector<128x32xf32>
    %37 = tpu.matmul %36, %14, %cst_26 {dimension_numbers = #tpu.dot_dimension_numbers<[1], [0], [0], [1], [0, 0, 1, 1], [], []>} : vector<128x104xf32>, vector<104x32xf32>, vector<128x32xf32> -> vector<128x32xf32>
    %c128_27 = arith.constant 128 : index
    %c0_28 = arith.constant 0 : index
    %38 = vector.load %arg5[%c128_27, %c0_28] : memref<288x64xf32, #tpu.memory_space<vmem>>, vector<32x64xf32>
    %cst_29 = arith.constant dense<0.000000e+00> : vector<128x64xf32>
    %39 = tpu.matmul %37, %38, %cst_29 {dimension_numbers = #tpu.dot_dimension_numbers<[1], [0], [0], [1], [0, 0, 1, 1], [], []>} : vector<128x32xf32>, vector<32x64xf32>, vector<128x64xf32> -> vector<128x64xf32>
    %40 = arith.addf %35, %39 : vector<128x64xf32>
    %c640 = arith.constant 640 : index
    %c0_30 = arith.constant 0 : index
    %41 = vector.load %arg4[%c640, %c0_30] : memref<1152x104xf32, #tpu.memory_space<vmem>>, vector<128x104xf32>
    %cst_31 = arith.constant dense<0.000000e+00> : vector<128x32xf32>
    %42 = tpu.matmul %41, %14, %cst_31 {dimension_numbers = #tpu.dot_dimension_numbers<[1], [0], [0], [1], [0, 0, 1, 1], [], []>} : vector<128x104xf32>, vector<104x32xf32>, vector<128x32xf32> -> vector<128x32xf32>
    %c160 = arith.constant 160 : index
    %c0_32 = arith.constant 0 : index
    %43 = vector.load %arg5[%c160, %c0_32] : memref<288x64xf32, #tpu.memory_space<vmem>>, vector<32x64xf32>
    %cst_33 = arith.constant dense<0.000000e+00> : vector<128x64xf32>
    %44 = tpu.matmul %42, %43, %cst_33 {dimension_numbers = #tpu.dot_dimension_numbers<[1], [0], [0], [1], [0, 0, 1, 1], [], []>} : vector<128x32xf32>, vector<32x64xf32>, vector<128x64xf32> -> vector<128x64xf32>
    %45 = arith.addf %40, %44 : vector<128x64xf32>
    %c768 = arith.constant 768 : index
    %c0_34 = arith.constant 0 : index
    %46 = vector.load %arg4[%c768, %c0_34] : memref<1152x104xf32, #tpu.memory_space<vmem>>, vector<128x104xf32>
    %cst_35 = arith.constant dense<0.000000e+00> : vector<128x32xf32>
    %47 = tpu.matmul %46, %14, %cst_35 {dimension_numbers = #tpu.dot_dimension_numbers<[1], [0], [0], [1], [0, 0, 1, 1], [], []>} : vector<128x104xf32>, vector<104x32xf32>, vector<128x32xf32> -> vector<128x32xf32>
    %c192 = arith.constant 192 : index
    %c0_36 = arith.constant 0 : index
    %48 = vector.load %arg5[%c192, %c0_36] : memref<288x64xf32, #tpu.memory_space<vmem>>, vector<32x64xf32>
    %cst_37 = arith.constant dense<0.000000e+00> : vector<128x64xf32>
    %49 = tpu.matmul %47, %48, %cst_37 {dimension_numbers = #tpu.dot_dimension_numbers<[1], [0], [0], [1], [0, 0, 1, 1], [], []>} : vector<128x32xf32>, vector<32x64xf32>, vector<128x64xf32> -> vector<128x64xf32>
    %50 = arith.addf %45, %49 : vector<128x64xf32>
    %c896 = arith.constant 896 : index
    %c0_38 = arith.constant 0 : index
    %51 = vector.load %arg4[%c896, %c0_38] : memref<1152x104xf32, #tpu.memory_space<vmem>>, vector<128x104xf32>
    %cst_39 = arith.constant dense<0.000000e+00> : vector<128x32xf32>
    %52 = tpu.matmul %51, %14, %cst_39 {dimension_numbers = #tpu.dot_dimension_numbers<[1], [0], [0], [1], [0, 0, 1, 1], [], []>} : vector<128x104xf32>, vector<104x32xf32>, vector<128x32xf32> -> vector<128x32xf32>
    %c224 = arith.constant 224 : index
    %c0_40 = arith.constant 0 : index
    %53 = vector.load %arg5[%c224, %c0_40] : memref<288x64xf32, #tpu.memory_space<vmem>>, vector<32x64xf32>
    %cst_41 = arith.constant dense<0.000000e+00> : vector<128x64xf32>
    %54 = tpu.matmul %52, %53, %cst_41 {dimension_numbers = #tpu.dot_dimension_numbers<[1], [0], [0], [1], [0, 0, 1, 1], [], []>} : vector<128x32xf32>, vector<32x64xf32>, vector<128x64xf32> -> vector<128x64xf32>
    %55 = arith.addf %50, %54 : vector<128x64xf32>
    %c1024 = arith.constant 1024 : index
    %c0_42 = arith.constant 0 : index
    %56 = vector.load %arg4[%c1024, %c0_42] : memref<1152x104xf32, #tpu.memory_space<vmem>>, vector<128x104xf32>
    %cst_43 = arith.constant dense<0.000000e+00> : vector<128x32xf32>
    %57 = tpu.matmul %56, %14, %cst_43 {dimension_numbers = #tpu.dot_dimension_numbers<[1], [0], [0], [1], [0, 0, 1, 1], [], []>} : vector<128x104xf32>, vector<104x32xf32>, vector<128x32xf32> -> vector<128x32xf32>
    %c256_44 = arith.constant 256 : index
    %c0_45 = arith.constant 0 : index
    %58 = vector.load %arg5[%c256_44, %c0_45] : memref<288x64xf32, #tpu.memory_space<vmem>>, vector<32x64xf32>
    %cst_46 = arith.constant dense<0.000000e+00> : vector<128x64xf32>
    %59 = tpu.matmul %57, %58, %cst_46 {dimension_numbers = #tpu.dot_dimension_numbers<[1], [0], [0], [1], [0, 0, 1, 1], [], []>} : vector<128x32xf32>, vector<32x64xf32>, vector<128x64xf32> -> vector<128x64xf32>
    %60 = arith.addf %55, %59 : vector<128x64xf32>
    %61 = vector.extract_strided_slice %60 {offsets = [0, 0], sizes = [32, 64], strides = [1, 1]} : vector<128x64xf32> to vector<32x64xf32>
    %62 = vector.extract_strided_slice %60 {offsets = [32, 0], sizes = [32, 64], strides = [1, 1]} : vector<128x64xf32> to vector<32x64xf32>
    %63 = arith.maximumf %61, %62 : vector<32x64xf32>
    %64 = vector.extract_strided_slice %60 {offsets = [64, 0], sizes = [32, 64], strides = [1, 1]} : vector<128x64xf32> to vector<32x64xf32>
    %65 = vector.extract_strided_slice %60 {offsets = [96, 0], sizes = [32, 64], strides = [1, 1]} : vector<128x64xf32> to vector<32x64xf32>
    %66 = arith.maximumf %64, %65 : vector<32x64xf32>
    %67 = arith.maximumf %63, %66 : vector<32x64xf32>
    %c0_47 = arith.constant 0 : index
    %c0_48 = arith.constant 0 : index
    %68 = vector.load %arg6[%c0_47, %c0_48] : memref<1x64xf32, #tpu.memory_space<vmem>>, vector<1x64xf32>
    %69 = vector.broadcast %68 : vector<1x64xf32> to vector<32x64xf32>
    %70 = arith.addf %67, %69 : vector<32x64xf32>
    %cst_49 = arith.constant 0.000000e+00 : f32
    %71 = vector.broadcast %cst_49 : f32 to vector<32x64xf32>
    %72 = arith.maximumf %70, %71 : vector<32x64xf32>
    %cst_50 = arith.constant 0.000000e+00 : f32
    %73 = vector.broadcast %cst_50 : f32 to vector<8x64xf32>
    %74 = vector.extract_strided_slice %72 {offsets = [0, 0], sizes = [8, 64], strides = [1, 1]} : vector<32x64xf32> to vector<8x64xf32>
    %c0_51 = arith.constant 0 : index
    %c0_52 = arith.constant 0 : index
    %75 = vector.load %arg7[%c0_51, %c0_52] : memref<256x64xf32, #tpu.memory_space<vmem>>, vector<64x64xf32>
    %cst_53 = arith.constant dense<0.000000e+00> : vector<8x64xf32>
    %76 = tpu.matmul %74, %75, %cst_53 {dimension_numbers = #tpu.dot_dimension_numbers<[1], [0], [0], [1], [0, 0, 1, 1], [], []>} : vector<8x64xf32>, vector<64x64xf32>, vector<8x64xf32> -> vector<8x64xf32>
    %77 = arith.addf %73, %76 : vector<8x64xf32>
    %78 = vector.extract_strided_slice %72 {offsets = [8, 0], sizes = [8, 64], strides = [1, 1]} : vector<32x64xf32> to vector<8x64xf32>
    %c64_54 = arith.constant 64 : index
    %c0_55 = arith.constant 0 : index
    %79 = vector.load %arg7[%c64_54, %c0_55] : memref<256x64xf32, #tpu.memory_space<vmem>>, vector<64x64xf32>
    %cst_56 = arith.constant dense<0.000000e+00> : vector<8x64xf32>
    %80 = tpu.matmul %78, %79, %cst_56 {dimension_numbers = #tpu.dot_dimension_numbers<[1], [0], [0], [1], [0, 0, 1, 1], [], []>} : vector<8x64xf32>, vector<64x64xf32>, vector<8x64xf32> -> vector<8x64xf32>
    %81 = arith.addf %77, %80 : vector<8x64xf32>
    %82 = vector.extract_strided_slice %72 {offsets = [16, 0], sizes = [8, 64], strides = [1, 1]} : vector<32x64xf32> to vector<8x64xf32>
    %c128_57 = arith.constant 128 : index
    %c0_58 = arith.constant 0 : index
    %83 = vector.load %arg7[%c128_57, %c0_58] : memref<256x64xf32, #tpu.memory_space<vmem>>, vector<64x64xf32>
    %cst_59 = arith.constant dense<0.000000e+00> : vector<8x64xf32>
    %84 = tpu.matmul %82, %83, %cst_59 {dimension_numbers = #tpu.dot_dimension_numbers<[1], [0], [0], [1], [0, 0, 1, 1], [], []>} : vector<8x64xf32>, vector<64x64xf32>, vector<8x64xf32> -> vector<8x64xf32>
    %85 = arith.addf %81, %84 : vector<8x64xf32>
    %86 = vector.extract_strided_slice %72 {offsets = [24, 0], sizes = [8, 64], strides = [1, 1]} : vector<32x64xf32> to vector<8x64xf32>
    %c192_60 = arith.constant 192 : index
    %c0_61 = arith.constant 0 : index
    %87 = vector.load %arg7[%c192_60, %c0_61] : memref<256x64xf32, #tpu.memory_space<vmem>>, vector<64x64xf32>
    %cst_62 = arith.constant dense<0.000000e+00> : vector<8x64xf32>
    %88 = tpu.matmul %86, %87, %cst_62 {dimension_numbers = #tpu.dot_dimension_numbers<[1], [0], [0], [1], [0, 0, 1, 1], [], []>} : vector<8x64xf32>, vector<64x64xf32>, vector<8x64xf32> -> vector<8x64xf32>
    %89 = arith.addf %85, %88 : vector<8x64xf32>
    %c0_63 = arith.constant 0 : index
    %c0_64 = arith.constant 0 : index
    %90 = vector.load %arg8[%c0_63, %c0_64] : memref<1x64xf32, #tpu.memory_space<vmem>>, vector<1x64xf32>
    %91 = vector.broadcast %90 : vector<1x64xf32> to vector<8x64xf32>
    %92 = arith.addf %89, %91 : vector<8x64xf32>
    %cst_65 = arith.constant 0.000000e+00 : f32
    %93 = vector.broadcast %cst_65 : f32 to vector<8x64xf32>
    %94 = arith.maximumf %92, %93 : vector<8x64xf32>
    %c0_66 = arith.constant 0 : index
    %c0_67 = arith.constant 0 : index
    %95 = vector.load %arg9[%c0_66, %c0_67] : memref<64x32xf32, #tpu.memory_space<vmem>>, vector<64x32xf32>
    %cst_68 = arith.constant dense<0.000000e+00> : vector<8x32xf32>
    %96 = tpu.matmul %94, %95, %cst_68 {dimension_numbers = #tpu.dot_dimension_numbers<[1], [0], [0], [1], [0, 0, 1, 1], [], []>} : vector<8x64xf32>, vector<64x32xf32>, vector<8x32xf32> -> vector<8x32xf32>
    %c0_69 = arith.constant 0 : index
    %c0_70 = arith.constant 0 : index
    %97 = vector.load %arg10[%c0_69, %c0_70] : memref<1x32xf32, #tpu.memory_space<vmem>>, vector<1x32xf32>
    %98 = vector.broadcast %97 : vector<1x32xf32> to vector<8x32xf32>
    %99 = arith.addf %96, %98 : vector<8x32xf32>
    %cst_71 = arith.constant 0.000000e+00 : f32
    %100 = vector.broadcast %cst_71 : f32 to vector<8x32xf32>
    %101 = arith.maximumf %99, %100 : vector<8x32xf32>
    %c0_72 = arith.constant 0 : index
    %c0_73 = arith.constant 0 : index
    %102 = vector.load %arg11[%c0_72, %c0_73] : memref<32x128xf32, #tpu.memory_space<vmem>>, vector<32x128xf32>
    %cst_74 = arith.constant dense<0.000000e+00> : vector<8x128xf32>
    %103 = tpu.matmul %101, %102, %cst_74 {dimension_numbers = #tpu.dot_dimension_numbers<[1], [0], [0], [1], [0, 0, 1, 1], [], []>} : vector<8x32xf32>, vector<32x128xf32>, vector<8x128xf32> -> vector<8x128xf32>
    %c0_75 = arith.constant 0 : index
    %c0_76 = arith.constant 0 : index
    %104 = vector.load %arg12[%c0_75, %c0_76] : memref<1x128xf32, #tpu.memory_space<vmem>>, vector<1x128xf32>
    %105 = vector.broadcast %104 : vector<1x128xf32> to vector<8x128xf32>
    %106 = arith.addf %103, %105 : vector<8x128xf32>
    %c0_77 = arith.constant 0 : index
    %c0_78 = arith.constant 0 : index
    %107 = vector.load %arg13[%c0_77, %c0_78] : memref<8x128xf32, #tpu.memory_space<vmem>>, vector<8x128xf32>
    tpu.vector_store %arg13[%c0_77, %c0_78], %106 {strides = array<i32>} : memref<8x128xf32, #tpu.memory_space<vmem>>, vector<8x128xf32>,
    return
  }
  func.func @transform_0(%arg0: i32) -> (i32, i32) {
    %c0_i32 = arith.constant 0 : i32
    %c0_i32_0 = arith.constant 0 : i32
    %c0_i32_1 = arith.constant 0 : i32
    return %c0_i32, %c0_i32_0 : i32, i32
  }
  func.func @transform_1(%arg0: i32) -> (i32, i32) {
    %c0_i32 = arith.constant 0 : i32
    %c0_i32_0 = arith.constant 0 : i32
    %c0_i32_1 = arith.constant 0 : i32
    return %c0_i32, %c0_i32_0 : i32, i32
  }
  func.func @transform_2(%arg0: i32) -> (i32, i32) {
    %c0_i32 = arith.constant 0 : i32
    %c0_i32_0 = arith.constant 0 : i32
    %c0_i32_1 = arith.constant 0 : i32
    return %c0_i32, %c0_i32_0 : i32, i32
  }
  func.func @transform_3(%arg0: i32) -> (i32, i32) {
    %c0_i32 = arith.constant 0 : i32
    %c0_i32_0 = arith.constant 0 : i32
    %c0_i32_1 = arith.constant 0 : i32
    return %c0_i32, %c0_i32_0 : i32, i32
  }
  func.func @transform_4(%arg0: i32) -> (i32, i32) {
    %c0_i32 = arith.constant 0 : i32
    %c0_i32_0 = arith.constant 0 : i32
    %c0_i32_1 = arith.constant 0 : i32
    return %c0_i32, %c0_i32_0 : i32, i32
  }
  func.func @transform_5(%arg0: i32) -> (i32, i32) {
    %c0_i32 = arith.constant 0 : i32
    %c0_i32_0 = arith.constant 0 : i32
    %c0_i32_1 = arith.constant 0 : i32
    return %c0_i32, %c0_i32_0 : i32, i32
  }
  func.func @transform_6(%arg0: i32) -> (i32, i32) {
    %c0_i32 = arith.constant 0 : i32
    %c0_i32_0 = arith.constant 0 : i32
    %c0_i32_1 = arith.constant 0 : i32
    return %c0_i32, %c0_i32_0 : i32, i32
  }
  func.func @transform_7(%arg0: i32) -> (i32, i32) {
    %c0_i32 = arith.constant 0 : i32
    %c0_i32_0 = arith.constant 0 : i32
    %c0_i32_1 = arith.constant 0 : i32
    return %c0_i32, %c0_i32_0 : i32, i32
  }
  func.func @transform_8(%arg0: i32) -> (i32, i32) {
    %c0_i32 = arith.constant 0 : i32
    %c0_i32_0 = arith.constant 0 : i32
    %c0_i32_1 = arith.constant 0 : i32
    return %c0_i32, %c0_i32_0 : i32, i32
  }
  func.func @transform_9(%arg0: i32) -> (i32, i32) {
    %c0_i32 = arith.constant 0 : i32
    %c0_i32_0 = arith.constant 0 : i32
    %c0_i32_1 = arith.constant 0 : i32
    return %c0_i32, %c0_i32_0 : i32, i32
  }
  func.func @transform_10(%arg0: i32) -> (i32, i32) {
    %c0_i32 = arith.constant 0 : i32
    %c0_i32_0 = arith.constant 0 : i32
    %c0_i32_1 = arith.constant 0 : i32
    return %c0_i32, %c0_i32_0 : i32, i32
  }
  func.func @transform_11(%arg0: i32) -> (i32, i32) {
    %c0_i32 = arith.constant 0 : i32
    %c0_i32_0 = arith.constant 0 : i32
    %c0_i32_1 = arith.constant 0 : i32
    return %c0_i32, %c0_i32_0 : i32, i32
  }
  func.func @transform_12(%arg0: i32) -> (i32, i32) {
    %c0_i32 = arith.constant 0 : i32
    %c0_i32_0 = arith.constant 0 : i32
    %c0_i32_1 = arith.constant 0 : i32
    return %c0_i32, %c0_i32_0 : i32, i32
  }
}

</mosaic_0001>

<llo_original>
// kernel: lenet_forward_pallas.1
$region0: #{lenet_forward_pallas.1}
  #allocation0 [shape = 'u32[]', space=smem, size = 0x4, offset = 0x4, fixed_abs, tag = 'smem constant byte address 0x4 - core index']
  #allocation1 [shape = 'u32[72,128]{1,0:T(1,128)}', space=vmem, size = 0x9000, scoped, tag = 'internal scratch']
  %s0 = inlined_call_operand.vmem [shape: f32[416,16], index: 0, kind: input, shape index: {}]
  %s1 = inlined_call_operand.vmem [shape: f32[16,32], index: 1, kind: input, shape index: {}]
  %s2 = inlined_call_operand.vmem [shape: f32[1,32], index: 2, kind: input, shape index: {}]
  %s3 = inlined_call_operand.vmem [shape: f32[1152,104], index: 3, kind: input, shape index: {}]
  %s4 = inlined_call_operand.vmem [shape: f32[288,64], index: 4, kind: input, shape index: {}]
  %s5 = inlined_call_operand.vmem [shape: f32[1,64], index: 5, kind: input, shape index: {}]
  %s6 = inlined_call_operand.vmem [shape: f32[256,64], index: 6, kind: input, shape index: {}]
  %s7 = inlined_call_operand.vmem [shape: f32[1,64], index: 7, kind: input, shape index: {}]
  %s8 = inlined_call_operand.vmem [shape: f32[64,32], index: 8, kind: input, shape index: {}]
  %s9 = inlined_call_operand.vmem [shape: f32[1,32], index: 9, kind: input, shape index: {}]
  %s10 = inlined_call_operand.vmem [shape: f32[32,128], index: 10, kind: input, shape index: {}]
  %s11 = inlined_call_operand.vmem [shape: f32[1,128], index: 11, kind: input, shape index: {}]
  %s12 = inlined_call_operand.vmem [shape: f32[8,128], index: 12, kind: output, shape index: {}]
  %s13 = sld [smem:[#allocation0]]
  $region58: #{lenet_forward_pallas.1} parent=0
    _
  %s15 = ssub.s32 1, %s13
  %s16 = scalar_select 0, %s15, %s13
  // Predicated region
  $region2: #{lenet_forward_pallas.1} parent=0 // pred_check
    _
  $region3: #{lenet_forward_pallas.1} parent=0 // pred_check_branch
    %18 = sbr.rel (0) target = $region5
  $region4: #{lenet_forward_pallas.1} parent=0 // pred_region
    _
  $region5: #{lenet_forward_pallas.1} parent=0 // pred_fallthru
    _
  // Predicated region
  $region6: #{lenet_forward_pallas.1} parent=0 // pred_check
    _
  $region7: #{lenet_forward_pallas.1} parent=0 // pred_check_branch
    %20 = sbr.rel (0) target = $region9
  $region8: #{lenet_forward_pallas.1} parent=0 // pred_region
    _
  $region9: #{lenet_forward_pallas.1} parent=0 // pred_fallthru
    _
  // Predicated region
  $region10: #{lenet_forward_pallas.1} parent=0 // pred_check
    _
  $region11: #{lenet_forward_pallas.1} parent=0 // pred_check_branch
    %22 = sbr.rel (0) target = $region13
  $region12: #{lenet_forward_pallas.1} parent=0 // pred_region
    _
  $region13: #{lenet_forward_pallas.1} parent=0 // pred_fallthru
    _
  // Predicated region
  $region14: #{lenet_forward_pallas.1} parent=0 // pred_check
    _
  $region15: #{lenet_forward_pallas.1} parent=0 // pred_check_branch
    %24 = sbr.rel (0) target = $region17
  $region16: #{lenet_forward_pallas.1} parent=0 // pred_region
    _
  $region17: #{lenet_forward_pallas.1} parent=0 // pred_fallthru
    _
  // Predicated region
  $region18: #{lenet_forward_pallas.1} parent=0 // pred_check
    _
  $region19: #{lenet_forward_pallas.1} parent=0 // pred_check_branch
    %26 = sbr.rel (0) target = $region21
  $region20: #{lenet_forward_pallas.1} parent=0 // pred_region
    _
  $region21: #{lenet_forward_pallas.1} parent=0 // pred_fallthru
    _
  // Predicated region
  $region22: #{lenet_forward_pallas.1} parent=0 // pred_check
    _
  $region23: #{lenet_forward_pallas.1} parent=0 // pred_check_branch
    %28 = sbr.rel (0) target = $region25
  $region24: #{lenet_forward_pallas.1} parent=0 // pred_region
    _
  $region25: #{lenet_forward_pallas.1} parent=0 // pred_fallthru
    _
  // Predicated region
  $region26: #{lenet_forward_pallas.1} parent=0 // pred_check
    _
  $region27: #{lenet_forward_pallas.1} parent=0 // pred_check_branch
    %30 = sbr.rel (0) target = $region29
  $region28: #{lenet_forward_pallas.1} parent=0 // pred_region
    _
  $region29: #{lenet_forward_pallas.1} parent=0 // pred_fallthru
    _
  // Predicated region
  $region30: #{lenet_forward_pallas.1} parent=0 // pred_check
    _
  $region31: #{lenet_forward_pallas.1} parent=0 // pred_check_branch
    %32 = sbr.rel (0) target = $region33
  $region32: #{lenet_forward_pallas.1} parent=0 // pred_region
    _
  $region33: #{lenet_forward_pallas.1} parent=0 // pred_fallthru
    _
  // Predicated region
  $region34: #{lenet_forward_pallas.1} parent=0 // pred_check
    _
  $region35: #{lenet_forward_pallas.1} parent=0 // pred_check_branch
    %34 = sbr.rel (0) target = $region37
  $region36: #{lenet_forward_pallas.1} parent=0 // pred_region
    _
  $region37: #{lenet_forward_pallas.1} parent=0 // pred_fallthru
    _
  // Predicated region
  $region38: #{lenet_forward_pallas.1} parent=0 // pred_check
    _
  $region39: #{lenet_forward_pallas.1} parent=0 // pred_check_branch
    %36 = sbr.rel (0) target = $region41
  $region40: #{lenet_forward_pallas.1} parent=0 // pred_region
    _
  $region41: #{lenet_forward_pallas.1} parent=0 // pred_fallthru
    _
  // Predicated region
  $region42: #{lenet_forward_pallas.1} parent=0 // pred_check
    _
  $region43: #{lenet_forward_pallas.1} parent=0 // pred_check_branch
    %38 = sbr.rel (0) target = $region45
  $region44: #{lenet_forward_pallas.1} parent=0 // pred_region
    _
  $region45: #{lenet_forward_pallas.1} parent=0 // pred_fallthru
    _
  // Predicated region
  $region46: #{lenet_forward_pallas.1} parent=0 // pred_check
    _
  $region47: #{lenet_forward_pallas.1} parent=0 // pred_check_branch
    %40 = sbr.rel (0) target = $region49
  $region48: #{lenet_forward_pallas.1} parent=0 // pred_region
    _
  $region49: #{lenet_forward_pallas.1} parent=0 // pred_fallthru
    _
  %v41 = vld [vmem:[%s0] sm:$0xff]
  %v42 = vld [vmem:[%s0 + $0x8] sm:$0xff]
  %v43 = vld [vmem:[%s0 + $0x10] sm:$0xff]
  %v44 = vld [vmem:[%s0 + $0x18] sm:$0xff]
  %v45 = vld [vmem:[%s0 + $0x20] sm:$0xff]
  %v46 = vld [vmem:[%s0 + $0x28] sm:$0xff]
  %v47 = vld [vmem:[%s0 + $0x30] sm:$0xff]
  %v48 = vld [vmem:[%s0 + $0x38] sm:$0xff]
  %v49 = vld [vmem:[%s0 + $0x40] sm:$0xff]
  %v50 = vld [vmem:[%s0 + $0x48] sm:$0xff]
  %v51 = vld [vmem:[%s0 + $0x50] sm:$0xff]
  %v52 = vld [vmem:[%s0 + $0x58] sm:$0xff]
  %v53 = vld [vmem:[%s0 + $0x60] sm:$0xff]
  %v54 = vld [vmem:[%s0 + $0x68] sm:$0xff]
  %v55 = vld [vmem:[%s0 + $0x70] sm:$0xff]
  %v56 = vld [vmem:[%s0 + $0x78] sm:$0xff]
  %v57 = vld [vmem:[%s0 + $0x80] sm:$0xff]
  %v58 = vld [vmem:[%s0 + $0x88] sm:$0xff]
  %v59 = vld [vmem:[%s0 + $0x90] sm:$0xff]
  %v60 = vld [vmem:[%s0 + $0x98] sm:$0xff]
  %v61 = vld [vmem:[%s0 + $0xa0] sm:$0xff]
  %v62 = vld [vmem:[%s0 + $0xa8] sm:$0xff]
  %v63 = vld [vmem:[%s0 + $0xb0] sm:$0xff]
  %v64 = vld [vmem:[%s0 + $0xb8] sm:$0xff]
  %v65 = vld [vmem:[%s0 + $0xc0] sm:$0xff]
  %v66 = vld [vmem:[%s0 + $0xc8] sm:$0xff]
  %v67 = vld [vmem:[%s0 + $0xd0] sm:$0xff]
  %v68 = vld [vmem:[%s0 + $0xd8] sm:$0xff]
  %v69 = vld [vmem:[%s0 + $0xe0] sm:$0xff]
  %v70 = vld [vmem:[%s0 + $0xe8] sm:$0xff]
  %v71 = vld [vmem:[%s0 + $0xf0] sm:$0xff]
  %v72 = vld [vmem:[%s0 + $0xf8] sm:$0xff]
  %v73 = vld [vmem:[%s0 + $0x100] sm:$0xff]
  %v74 = vld [vmem:[%s0 + $0x108] sm:$0xff]
  %v75 = vld [vmem:[%s0 + $0x110] sm:$0xff]
  %v76 = vld [vmem:[%s0 + $0x118] sm:$0xff]
  %v77 = vld [vmem:[%s0 + $0x120] sm:$0xff]
  %v78 = vld [vmem:[%s0 + $0x128] sm:$0xff]
  %v79 = vld [vmem:[%s0 + $0x130] sm:$0xff]
  %v80 = vld [vmem:[%s0 + $0x138] sm:$0xff]
  %v81 = vld [vmem:[%s0 + $0x140] sm:$0xff]
  %v82 = vld [vmem:[%s0 + $0x148] sm:$0xff]
  %v83 = vld [vmem:[%s0 + $0x150] sm:$0xff]
  %v84 = vld [vmem:[%s0 + $0x158] sm:$0xff]
  %v85 = vld [vmem:[%s0 + $0x160] sm:$0xff]
  %v86 = vld [vmem:[%s0 + $0x168] sm:$0xff]
  %v87 = vld [vmem:[%s0 + $0x170] sm:$0xff]
  %v88 = vld [vmem:[%s0 + $0x178] sm:$0xff]
  %v89 = vld [vmem:[%s0 + $0x180] sm:$0xff]
  %v90 = vld [vmem:[%s0 + $0x188] sm:$0xff]
  %v91 = vld [vmem:[%s0 + $0x190] sm:$0xff]
  %v92 = vld [vmem:[%s0 + $0x198] sm:$0xff]
  %v93 = vld [vmem:[%s1] sm:$0xff]
  %v94 = vld [vmem:[%s1 + $0x8] sm:$0xff]
  %vm95 = vcmask 130048
  %v97 = vsel %vm95, %v41, 0
  %v100 = vsel %vm95, %v42, 0
  %v103 = vsel %vm95, %v43, 0
  %v106 = vsel %vm95, %v44, 0
  %v109 = vsel %vm95, %v45, 0
  %v112 = vsel %vm95, %v46, 0
  %v115 = vsel %vm95, %v47, 0
  %v118 = vsel %vm95, %v48, 0
  %v121 = vsel %vm95, %v49, 0
  %v124 = vsel %vm95, %v50, 0
  %v127 = vsel %vm95, %v51, 0
  %v130 = vsel %vm95, %v52, 0
  %v133 = vsel %vm95, %v53, 0
  %v136 = vsel %vm95, %v54, 0
  %v139 = vsel %vm95, %v55, 0
  %v142 = vsel %vm95, %v56, 0
  %v145 = vsel %vm95, %v57, 0
  %v148 = vsel %vm95, %v58, 0
  %v151 = vsel %vm95, %v59, 0
  %v154 = vsel %vm95, %v60, 0
  %v157 = vsel %vm95, %v61, 0
  %v160 = vsel %vm95, %v62, 0
  %v163 = vsel %vm95, %v63, 0
  %v166 = vsel %vm95, %v64, 0
  %v169 = vsel %vm95, %v65, 0
  %v172 = vsel %vm95, %v66, 0
  %v175 = vsel %vm95, %v67, 0
  %v178 = vsel %vm95, %v68, 0
  %v181 = vsel %vm95, %v69, 0
  %v184 = vsel %vm95, %v70, 0
  %v187 = vsel %vm95, %v71, 0
  %v190 = vsel %vm95, %v72, 0
  %v193 = vsel %vm95, %v73, 0
  %v196 = vsel %vm95, %v74, 0
  %v199 = vsel %vm95, %v75, 0
  %v202 = vsel %vm95, %v76, 0
  %v205 = vsel %vm95, %v77, 0
  %v208 = vsel %vm95, %v78, 0
  %v211 = vsel %vm95, %v79, 0
  %v214 = vsel %vm95, %v80, 0
  %v217 = vsel %vm95, %v81, 0
  %v220 = vsel %vm95, %v82, 0
  %v223 = vsel %vm95, %v83, 0
  %v226 = vsel %vm95, %v84, 0
  %v229 = vsel %vm95, %v85, 0
  %v232 = vsel %vm95, %v86, 0
  %v235 = vsel %vm95, %v87, 0
  %v238 = vsel %vm95, %v88, 0
  %v241 = vsel %vm95, %v89, 0
  %v244 = vsel %vm95, %v90, 0
  %v247 = vsel %vm95, %v91, 0
  %v250 = vsel %vm95, %v92, 0
  %252 = vmatpush.msra.mxu0 0.0
  %253 = vmatpush.msra.mxu0 0.0
  %254 = vmatpush.msra.mxu0 0.0
  %255 = vmatpush.msra.mxu0 0.0
  %256 = vmatpush.msra.mxu0 0.0
  %257 = vmatpush.msra.mxu0 0.0
  %258 = vmatpush.msra.mxu0 0.0
  %259 = vmatpush.msra.mxu0 0.0
  %260 = vmatpush.msra.mxu0 0.0
  %261 = vmatpush.msra.mxu0 0.0
  %262 = vmatpush.msra.mxu0 0.0
  %263 = vmatpush.msra.mxu0 0.0
  %264 = vmatpush.msra.mxu0 0.0
  %265 = vmatpush.msra.mxu0 0.0
  %266 = vmatpush.msra.mxu0 %v94
  %267 = vmatpush.msra.mxu0 %v93
  %268 = vmatmul.f32.gmra.mxu0 %v97
  %v269 = vpop.f32.mrf.mxu0
  %v270 = vadd.f32 0.0, %v269
  %271 = vmatmul.f32.gmra.mxu0 %v100
  %v272 = vpop.f32.mrf.mxu0
  %v273 = vadd.f32 0.0, %v272
  %274 = vmatmul.f32.gmra.mxu0 %v103
  %v275 = vpop.f32.mrf.mxu0
  %v276 = vadd.f32 0.0, %v275
  %277 = vmatmul.f32.gmra.mxu0 %v106
  %v278 = vpop.f32.mrf.mxu0
  %v279 = vadd.f32 0.0, %v278
  %280 = vmatmul.f32.gmra.mxu0 %v109
  %v281 = vpop.f32.mrf.mxu0
  %v282 = vadd.f32 0.0, %v281
  %283 = vmatmul.f32.gmra.mxu0 %v112
  %v284 = vpop.f32.mrf.mxu0
  %v285 = vadd.f32 0.0, %v284
  %286 = vmatmul.f32.gmra.mxu0 %v115
  %v287 = vpop.f32.mrf.mxu0
  %v288 = vadd.f32 0.0, %v287
  %289 = vmatmul.f32.gmra.mxu0 %v118
  %v290 = vpop.f32.mrf.mxu0
  %v291 = vadd.f32 0.0, %v290
  %292 = vmatmul.f32.gmra.mxu0 %v121
  %v293 = vpop.f32.mrf.mxu0
  %v294 = vadd.f32 0.0, %v293
  %295 = vmatmul.f32.gmra.mxu0 %v124
  %v296 = vpop.f32.mrf.mxu0
  %v297 = vadd.f32 0.0, %v296
  %298 = vmatmul.f32.gmra.mxu0 %v127
  %v299 = vpop.f32.mrf.mxu0
  %v300 = vadd.f32 0.0, %v299
  %301 = vmatmul.f32.gmra.mxu0 %v130
  %v302 = vpop.f32.mrf.mxu0
  %v303 = vadd.f32 0.0, %v302
  %304 = vmatmul.f32.gmra.mxu0 %v133
  %v305 = vpop.f32.mrf.mxu0
  %v306 = vadd.f32 0.0, %v305
  %307 = vmatmul.f32.gmra.mxu0 %v136
  %v308 = vpop.f32.mrf.mxu0
  %v309 = vadd.f32 0.0, %v308
  %310 = vmatmul.f32.gmra.mxu0 %v139
  %v311 = vpop.f32.mrf.mxu0
  %v312 = vadd.f32 0.0, %v311
  %313 = vmatmul.f32.gmra.mxu0 %v142
  %v314 = vpop.f32.mrf.mxu0
  %v315 = vadd.f32 0.0, %v314
  %316 = vmatmul.f32.gmra.mxu0 %v145
  %v317 = vpop.f32.mrf.mxu0
  %v318 = vadd.f32 0.0, %v317
  %319 = vmatmul.f32.gmra.mxu0 %v148
  %v320 = vpop.f32.mrf.mxu0
  %v321 = vadd.f32 0.0, %v320
  %322 = vmatmul.f32.gmra.mxu0 %v151
  %v323 = vpop.f32.mrf.mxu0
  %v324 = vadd.f32 0.0, %v323
  %325 = vmatmul.f32.gmra.mxu0 %v154
  %v326 = vpop.f32.mrf.mxu0
  %v327 = vadd.f32 0.0, %v326
  %328 = vmatmul.f32.gmra.mxu0 %v157
  %v329 = vpop.f32.mrf.mxu0
  %v330 = vadd.f32 0.0, %v329
  %331 = vmatmul.f32.gmra.mxu0 %v160
  %v332 = vpop.f32.mrf.mxu0
  %v333 = vadd.f32 0.0, %v332
  %334 = vmatmul.f32.gmra.mxu0 %v163
  %v335 = vpop.f32.mrf.mxu0
  %v336 = vadd.f32 0.0, %v335
  %337 = vmatmul.f32.gmra.mxu0 %v166
  %v338 = vpop.f32.mrf.mxu0
  %v339 = vadd.f32 0.0, %v338
  %340 = vmatmul.f32.gmra.mxu0 %v169
  %v341 = vpop.f32.mrf.mxu0
  %v342 = vadd.f32 0.0, %v341
  %343 = vmatmul.f32.gmra.mxu0 %v172
  %v344 = vpop.f32.mrf.mxu0
  %v345 = vadd.f32 0.0, %v344
  %346 = vmatmul.f32.gmra.mxu0 %v175
  %v347 = vpop.f32.mrf.mxu0
  %v348 = vadd.f32 0.0, %v347
  %349 = vmatmul.f32.gmra.mxu0 %v178
  %v350 = vpop.f32.mrf.mxu0
  %v351 = vadd.f32 0.0, %v350
  %352 = vmatmul.f32.gmra.mxu0 %v181
  %v353 = vpop.f32.mrf.mxu0
  %v354 = vadd.f32 0.0, %v353
  %355 = vmatmul.f32.gmra.mxu0 %v184
  %v356 = vpop.f32.mrf.mxu0
  %v357 = vadd.f32 0.0, %v356
  %358 = vmatmul.f32.gmra.mxu0 %v187
  %v359 = vpop.f32.mrf.mxu0
  %v360 = vadd.f32 0.0, %v359
  %361 = vmatmul.f32.gmra.mxu0 %v190
  %v362 = vpop.f32.mrf.mxu0
  %v363 = vadd.f32 0.0, %v362
  %364 = vmatmul.f32.gmra.mxu0 %v193
  %v365 = vpop.f32.mrf.mxu0
  %v366 = vadd.f32 0.0, %v365
  %367 = vmatmul.f32.gmra.mxu0 %v196
  %v368 = vpop.f32.mrf.mxu0
  %v369 = vadd.f32 0.0, %v368
  %370 = vmatmul.f32.gmra.mxu0 %v199
  %v371 = vpop.f32.mrf.mxu0
  %v372 = vadd.f32 0.0, %v371
  %373 = vmatmul.f32.gmra.mxu0 %v202
  %v374 = vpop.f32.mrf.mxu0
  %v375 = vadd.f32 0.0, %v374
  %376 = vmatmul.f32.gmra.mxu0 %v205
  %v377 = vpop.f32.mrf.mxu0
  %v378 = vadd.f32 0.0, %v377
  %379 = vmatmul.f32.gmra.mxu0 %v208
  %v380 = vpop.f32.mrf.mxu0
  %v381 = vadd.f32 0.0, %v380
  %382 = vmatmul.f32.gmra.mxu0 %v211
  %v383 = vpop.f32.mrf.mxu0
  %v384 = vadd.f32 0.0, %v383
  %385 = vmatmul.f32.gmra.mxu0 %v214
  %v386 = vpop.f32.mrf.mxu0
  %v387 = vadd.f32 0.0, %v386
  %388 = vmatmul.f32.gmra.mxu0 %v217
  %v389 = vpop.f32.mrf.mxu0
  %v390 = vadd.f32 0.0, %v389
  %391 = vmatmul.f32.gmra.mxu0 %v220
  %v392 = vpop.f32.mrf.mxu0
  %v393 = vadd.f32 0.0, %v392
  %394 = vmatmul.f32.gmra.mxu0 %v223
  %v395 = vpop.f32.mrf.mxu0
  %v396 = vadd.f32 0.0, %v395
  %397 = vmatmul.f32.gmra.mxu0 %v226
  %v398 = vpop.f32.mrf.mxu0
  %v399 = vadd.f32 0.0, %v398
  %400 = vmatmul.f32.gmra.mxu0 %v229
  %v401 = vpop.f32.mrf.mxu0
  %v402 = vadd.f32 0.0, %v401
  %403 = vmatmul.f32.gmra.mxu0 %v232
  %v404 = vpop.f32.mrf.mxu0
  %v405 = vadd.f32 0.0, %v404
  %406 = vmatmul.f32.gmra.mxu0 %v235
  %v407 = vpop.f32.mrf.mxu0
  %v408 = vadd.f32 0.0, %v407
  %409 = vmatmul.f32.gmra.mxu0 %v238
  %v410 = vpop.f32.mrf.mxu0
  %v411 = vadd.f32 0.0, %v410
  %412 = vmatmul.f32.gmra.mxu0 %v241
  %v413 = vpop.f32.mrf.mxu0
  %v414 = vadd.f32 0.0, %v413
  %415 = vmatmul.f32.gmra.mxu0 %v244
  %v416 = vpop.f32.mrf.mxu0
  %v417 = vadd.f32 0.0, %v416
  %418 = vmatmul.f32.gmra.mxu0 %v247
  %v419 = vpop.f32.mrf.mxu0
  %v420 = vadd.f32 0.0, %v419
  %421 = vmatmul.f32.gmra.mxu0 %v250
  %v422 = vpop.f32.mrf.mxu0
  %v423 = vadd.f32 0.0, %v422
  %424 = vdwg.mxu0
  %v425 = vmax.f32 %v270, %v309
  %v426 = vmax.f32 %v273, %v312
  %v427 = vmax.f32 %v276, %v315
  %v428 = vmax.f32 %v279, %v318
  %v429 = vmax.f32 %v282, %v321
  %v430 = vmax.f32 %v285, %v324
  %v431 = vmax.f32 %v288, %v327
  %v432 = vmax.f32 %v291, %v330
  %v433 = vmax.f32 %v294, %v333
  %v434 = vmax.f32 %v297, %v336
  %v435 = vmax.f32 %v300, %v339
  %v436 = vmax.f32 %v303, %v342
  %v437 = vmax.f32 %v306, %v345
  %v438 = vmax.f32 %v348, %v387
  %v439 = vmax.f32 %v351, %v390
  %v440 = vmax.f32 %v354, %v393
  %v441 = vmax.f32 %v357, %v396
  %v442 = vmax.f32 %v360, %v399
  %v443 = vmax.f32 %v363, %v402
  %v444 = vmax.f32 %v366, %v405
  %v445 = vmax.f32 %v369, %v408
  %v446 = vmax.f32 %v372, %v411
  %v447 = vmax.f32 %v375, %v414
  %v448 = vmax.f32 %v378, %v417
  %v449 = vmax.f32 %v381, %v420
  %v450 = vmax.f32 %v384, %v423
  %v451 = vmax.f32 %v425, %v438
  %v452 = vmax.f32 %v426, %v439
  %v453 = vmax.f32 %v427, %v440
  %v454 = vmax.f32 %v428, %v441
  %v455 = vmax.f32 %v429, %v442
  %v456 = vmax.f32 %v430, %v443
  %v457 = vmax.f32 %v431, %v444
  %v458 = vmax.f32 %v432, %v445
  %v459 = vmax.f32 %v433, %v446
  %v460 = vmax.f32 %v434, %v447
  %v461 = vmax.f32 %v435, %v448
  %v462 = vmax.f32 %v436, %v449
  %v463 = vmax.f32 %v437, %v450
  %v464 = vld [vmem:[%s2] sm:$0x1]
  %v466 = vperm.slane %v464, 0
  %v468 = vadd.f32 %v451, %v466
  %v469 = vadd.f32 %v452, %v466
  %v470 = vadd.f32 %v453, %v466
  %v471 = vadd.f32 %v454, %v466
  %v472 = vadd.f32 %v455, %v466
  %v473 = vadd.f32 %v456, %v466
  %v474 = vadd.f32 %v457, %v466
  %v475 = vadd.f32 %v458, %v466
  %v476 = vadd.f32 %v459, %v466
  %v477 = vadd.f32 %v460, %v466
  %v478 = vadd.f32 %v461, %v466
  %v479 = vadd.f32 %v462, %v466
  %v480 = vadd.f32 %v463, %v466
  %v481 = vmax.f32 %v468, 0.0
  %v482 = vmax.f32 %v469, 0.0
  %v483 = vmax.f32 %v470, 0.0
  %v484 = vmax.f32 %v471, 0.0
  %v485 = vmax.f32 %v472, 0.0
  %v486 = vmax.f32 %v473, 0.0
  %v487 = vmax.f32 %v474, 0.0
  %v488 = vmax.f32 %v475, 0.0
  %v489 = vmax.f32 %v476, 0.0
  %v490 = vmax.f32 %v477, 0.0
  %v491 = vmax.f32 %v478, 0.0
  %v492 = vmax.f32 %v479, 0.0
  %v493 = vmax.f32 %v480, 0.0
  %v494 = vld [vmem:[%s3] sm:$0xff]
  %v495 = vld [vmem:[%s3 + $0x8] sm:$0xff]
  %v496 = vld [vmem:[%s3 + $0x10] sm:$0xff]
  %v497 = vld [vmem:[%s3 + $0x18] sm:$0xff]
  %v498 = vld [vmem:[%s3 + $0x20] sm:$0xff]
  %v499 = vld [vmem:[%s3 + $0x28] sm:$0xff]
  %v500 = vld [vmem:[%s3 + $0x30] sm:$0xff]
  %v501 = vld [vmem:[%s3 + $0x38] sm:$0xff]
  %v502 = vld [vmem:[%s3 + $0x40] sm:$0xff]
  %v503 = vld [vmem:[%s3 + $0x48] sm:$0xff]
  %v504 = vld [vmem:[%s3 + $0x50] sm:$0xff]
  %v505 = vld [vmem:[%s3 + $0x58] sm:$0xff]
  %v506 = vld [vmem:[%s3 + $0x60] sm:$0xff]
  %v507 = vld [vmem:[%s3 + $0x68] sm:$0xff]
  %v508 = vld [vmem:[%s3 + $0x70] sm:$0xff]
  %v509 = vld [vmem:[%s3 + $0x78] sm:$0xff]
  %vm510 = vcmask 850944
  %v512 = vsel %vm510, %v494, 0
  %v515 = vsel %vm510, %v495, 0
  %v518 = vsel %vm510, %v496, 0
  %v521 = vsel %vm510, %v497, 0
  %v524 = vsel %vm510, %v498, 0
  %v527 = vsel %vm510, %v499, 0
  %v530 = vsel %vm510, %v500, 0
  %v533 = vsel %vm510, %v501, 0
  %v536 = vsel %vm510, %v502, 0
  %v539 = vsel %vm510, %v503, 0
  %v542 = vsel %vm510, %v504, 0
  %v545 = vsel %vm510, %v505, 0
  %v548 = vsel %vm510, %v506, 0
  %v551 = vsel %vm510, %v507, 0
  %v554 = vsel %vm510, %v508, 0
  %v557 = vsel %vm510, %v509, 0
  %559 = vmatpush.msra.mxu0 0.0
  %560 = vmatpush.msra.mxu0 0.0
  %561 = vmatpush.msra.mxu0 0.0
  %562 = vmatpush.msra.mxu0 %v493
  %563 = vmatpush.msra.mxu0 %v492
  %564 = vmatpush.msra.mxu0 %v491
  %565 = vmatpush.msra.mxu0 %v490
  %566 = vmatpush.msra.mxu0 %v489
  %567 = vmatpush.msra.mxu0 %v488
  %568 = vmatpush.msra.mxu0 %v487
  %569 = vmatpush.msra.mxu0 %v486
  %570 = vmatpush.msra.mxu0 %v485
  %571 = vmatpush.msra.mxu0 %v484
  %572 = vmatpush.msra.mxu0 %v483
  %573 = vmatpush.msra.mxu0 %v482
  %574 = vmatpush.msra.mxu0 %v481
  %575 = vmatmul.f32.gmra.mxu0 %v512
  %v576 = vpop.f32.mrf.mxu0
  %v577 = vadd.f32 0.0, %v576
  %578 = vmatmul.f32.gmra.mxu0 %v515
  %v579 = vpop.f32.mrf.mxu0
  %v580 = vadd.f32 0.0, %v579
  %581 = vmatmul.f32.gmra.mxu0 %v518
  %v582 = vpop.f32.mrf.mxu0
  %v583 = vadd.f32 0.0, %v582
  %584 = vmatmul.f32.gmra.mxu0 %v521
  %v585 = vpop.f32.mrf.mxu0
  %v586 = vadd.f32 0.0, %v585
  %587 = vmatmul.f32.gmra.mxu0 %v524
  %v588 = vpop.f32.mrf.mxu0
  %v589 = vadd.f32 0.0, %v588
  %590 = vmatmul.f32.gmra.mxu0 %v527
  %v591 = vpop.f32.mrf.mxu0
  %v592 = vadd.f32 0.0, %v591
  %593 = vmatmul.f32.gmra.mxu0 %v530
  %v594 = vpop.f32.mrf.mxu0
  %v595 = vadd.f32 0.0, %v594
  %596 = vmatmul.f32.gmra.mxu0 %v533
  %v597 = vpop.f32.mrf.mxu0
  %v598 = vadd.f32 0.0, %v597
  %599 = vmatmul.f32.gmra.mxu0 %v536
  %v600 = vpop.f32.mrf.mxu0
  %v601 = vadd.f32 0.0, %v600
  %602 = vmatmul.f32.gmra.mxu0 %v539
  %v603 = vpop.f32.mrf.mxu0
  %v604 = vadd.f32 0.0, %v603
  %605 = vmatmul.f32.gmra.mxu0 %v542
  %v606 = vpop.f32.mrf.mxu0
  %v607 = vadd.f32 0.0, %v606
  %608 = vmatmul.f32.gmra.mxu0 %v545
  %v609 = vpop.f32.mrf.mxu0
  %v610 = vadd.f32 0.0, %v609
  %611 = vmatmul.f32.gmra.mxu0 %v548
  %v612 = vpop.f32.mrf.mxu0
  %v613 = vadd.f32 0.0, %v612
  %614 = vmatmul.f32.gmra.mxu0 %v551
  %v615 = vpop.f32.mrf.mxu0
  %v616 = vadd.f32 0.0, %v615
  %617 = vmatmul.f32.gmra.mxu0 %v554
  %v618 = vpop.f32.mrf.mxu0
  %v619 = vadd.f32 0.0, %v618
  %620 = vmatmul.f32.gmra.mxu0 %v557
  %v621 = vpop.f32.mrf.mxu0
  %v622 = vadd.f32 0.0, %v621
  %623 = vdwg.mxu0
  %v624 = vld [vmem:[%s4] sm:$0xff]
  %v625 = vld [vmem:[%s4 + $0x8] sm:$0xff]
  %v626 = vld [vmem:[%s4 + $0x10] sm:$0xff]
  %v627 = vld [vmem:[%s4 + $0x18] sm:$0xff]
  %v628 = vld [vmem:[%s3 + $0x80] sm:$0xff]
  %v629 = vld [vmem:[%s3 + $0x88] sm:$0xff]
  %v630 = vld [vmem:[%s3 + $0x90] sm:$0xff]
  %v631 = vld [vmem:[%s3 + $0x98] sm:$0xff]
  %v632 = vld [vmem:[%s3 + $0xa0] sm:$0xff]
  %v633 = vld [vmem:[%s3 + $0xa8] sm:$0xff]
  %v634 = vld [vmem:[%s3 + $0xb0] sm:$0xff]
  %v635 = vld [vmem:[%s3 + $0xb8] sm:$0xff]
  %v636 = vld [vmem:[%s3 + $0xc0] sm:$0xff]
  %v637 = vld [vmem:[%s3 + $0xc8] sm:$0xff]
  %v638 = vld [vmem:[%s3 + $0xd0] sm:$0xff]
  %v639 = vld [vmem:[%s3 + $0xd8] sm:$0xff]
  %v640 = vld [vmem:[%s3 + $0xe0] sm:$0xff]
  %v641 = vld [vmem:[%s3 + $0xe8] sm:$0xff]
  %v642 = vld [vmem:[%s3 + $0xf0] sm:$0xff]
  %v643 = vld [vmem:[%s3 + $0xf8] sm:$0xff]
  %v645 = vsel %vm510, %v628, 0
  %v648 = vsel %vm510, %v629, 0
  %v651 = vsel %vm510, %v630, 0
  %v654 = vsel %vm510, %v631, 0
  %v657 = vsel %vm510, %v632, 0
  %v660 = vsel %vm510, %v633, 0
  %v663 = vsel %vm510, %v634, 0
  %v666 = vsel %vm510, %v635, 0
  %v669 = vsel %vm510, %v636, 0
  %v672 = vsel %vm510, %v637, 0
  %v675 = vsel %vm510, %v638, 0
  %v678 = vsel %vm510, %v639, 0
  %v681 = vsel %vm510, %v640, 0
  %v684 = vsel %vm510, %v641, 0
  %v687 = vsel %vm510, %v642, 0
  %v690 = vsel %vm510, %v643, 0
  %692 = vmatpush.msra.mxu0 0.0
  %693 = vmatpush.msra.mxu0 0.0
  %694 = vmatpush.msra.mxu0 0.0
  %695 = vmatpush.msra.mxu0 %v493
  %696 = vmatpush.msra.mxu0 %v492
  %697 = vmatpush.msra.mxu0 %v491
  %698 = vmatpush.msra.mxu0 %v490
  %699 = vmatpush.msra.mxu0 %v489
  %700 = vmatpush.msra.mxu0 %v488
  %701 = vmatpush.msra.mxu0 %v487
  %702 = vmatpush.msra.mxu0 %v486
  %703 = vmatpush.msra.mxu0 %v485
  %704 = vmatpush.msra.mxu0 %v484
  %705 = vmatpush.msra.mxu0 %v483
  %706 = vmatpush.msra.mxu0 %v482
  %707 = vmatpush.msra.mxu0 %v481
  %708 = vmatmul.f32.gmra.mxu0 %v645
  %v709 = vpop.f32.mrf.mxu0
  %v710 = vadd.f32 0.0, %v709
  %711 = vmatmul.f32.gmra.mxu0 %v648
  %v712 = vpop.f32.mrf.mxu0
  %v713 = vadd.f32 0.0, %v712
  %714 = vmatmul.f32.gmra.mxu0 %v651
  %v715 = vpop.f32.mrf.mxu0
  %v716 = vadd.f32 0.0, %v715
  %717 = vmatmul.f32.gmra.mxu0 %v654
  %v718 = vpop.f32.mrf.mxu0
  %v719 = vadd.f32 0.0, %v718
  %720 = vmatmul.f32.gmra.mxu0 %v657
  %v721 = vpop.f32.mrf.mxu0
  %v722 = vadd.f32 0.0, %v721
  %723 = vmatmul.f32.gmra.mxu0 %v660
  %v724 = vpop.f32.mrf.mxu0
  %v725 = vadd.f32 0.0, %v724
  %726 = vmatmul.f32.gmra.mxu0 %v663
  %v727 = vpop.f32.mrf.mxu0
  %v728 = vadd.f32 0.0, %v727
  %729 = vmatmul.f32.gmra.mxu0 %v666
  %v730 = vpop.f32.mrf.mxu0
  %v731 = vadd.f32 0.0, %v730
  %732 = vmatmul.f32.gmra.mxu0 %v669
  %v733 = vpop.f32.mrf.mxu0
  %v734 = vadd.f32 0.0, %v733
  %735 = vmatmul.f32.gmra.mxu0 %v672
  %v736 = vpop.f32.mrf.mxu0
  %v737 = vadd.f32 0.0, %v736
  %738 = vmatmul.f32.gmra.mxu0 %v675
  %v739 = vpop.f32.mrf.mxu0
  %v740 = vadd.f32 0.0, %v739
  %741 = vmatmul.f32.gmra.mxu0 %v678
  %v742 = vpop.f32.mrf.mxu0
  %v743 = vadd.f32 0.0, %v742
  %744 = vmatmul.f32.gmra.mxu0 %v681
  %v745 = vpop.f32.mrf.mxu0
  %v746 = vadd.f32 0.0, %v745
  %747 = vmatmul.f32.gmra.mxu0 %v684
  %v748 = vpop.f32.mrf.mxu0
  %v749 = vadd.f32 0.0, %v748
  %750 = vmatmul.f32.gmra.mxu0 %v687
  %v751 = vpop.f32.mrf.mxu0
  %v752 = vadd.f32 0.0, %v751
  %753 = vmatmul.f32.gmra.mxu0 %v690
  %v754 = vpop.f32.mrf.mxu0
  %v755 = vadd.f32 0.0, %v754
  %756 = vdwg.mxu0
  %v757 = vld [vmem:[%s4 + $0x20] sm:$0xff]
  %v758 = vld [vmem:[%s4 + $0x28] sm:$0xff]
  %v759 = vld [vmem:[%s4 + $0x30] sm:$0xff]
  %v760 = vld [vmem:[%s4 + $0x38] sm:$0xff]
  %vm761 = vcmask 261120
  %v763 = vsel %vm761, %v710, 0
  %v766 = vsel %vm761, %v713, 0
  %v769 = vsel %vm761, %v716, 0
  %v772 = vsel %vm761, %v719, 0
  %v775 = vsel %vm761, %v722, 0
  %v778 = vsel %vm761, %v725, 0
  %v781 = vsel %vm761, %v728, 0
  %v784 = vsel %vm761, %v731, 0
  %v787 = vsel %vm761, %v734, 0
  %v790 = vsel %vm761, %v737, 0
  %v793 = vsel %vm761, %v740, 0
  %v796 = vsel %vm761, %v743, 0
  %v799 = vsel %vm761, %v746, 0
  %v802 = vsel %vm761, %v749, 0
  %v805 = vsel %vm761, %v752, 0
  %v808 = vsel %vm761, %v755, 0
  %810 = vmatpush.msra.mxu0 0.0
  %811 = vmatpush.msra.mxu0 0.0
  %812 = vmatpush.msra.mxu0 0.0
  %813 = vmatpush.msra.mxu0 0.0
  %814 = vmatpush.msra.mxu0 0.0
  %815 = vmatpush.msra.mxu0 0.0
  %816 = vmatpush.msra.mxu0 0.0
  %817 = vmatpush.msra.mxu0 0.0
  %818 = vmatpush.msra.mxu0 0.0
  %819 = vmatpush.msra.mxu0 0.0
  %820 = vmatpush.msra.mxu0 0.0
  %821 = vmatpush.msra.mxu0 0.0
  %822 = vmatpush.msra.mxu0 %v760
  %823 = vmatpush.msra.mxu0 %v759
  %824 = vmatpush.msra.mxu0 %v758
  %825 = vmatpush.msra.mxu0 %v757
  %826 = vmatmul.f32.gmra.mxu0 %v763
  %v827 = vpop.f32.mrf.mxu0
  %v828 = vadd.f32 0.0, %v827
  %829 = vmatmul.f32.gmra.mxu0 %v766
  %v830 = vpop.f32.mrf.mxu0
  %v831 = vadd.f32 0.0, %v830
  %832 = vmatmul.f32.gmra.mxu0 %v769
  %v833 = vpop.f32.mrf.mxu0
  %v834 = vadd.f32 0.0, %v833
  %835 = vmatmul.f32.gmra.mxu0 %v772
  %v836 = vpop.f32.mrf.mxu0
  %v837 = vadd.f32 0.0, %v836
  %838 = vmatmul.f32.gmra.mxu0 %v775
  %v839 = vpop.f32.mrf.mxu0
  %v840 = vadd.f32 0.0, %v839
  %841 = vmatmul.f32.gmra.mxu0 %v778
  %v842 = vpop.f32.mrf.mxu0
  %v843 = vadd.f32 0.0, %v842
  %844 = vmatmul.f32.gmra.mxu0 %v781
  %v845 = vpop.f32.mrf.mxu0
  %v846 = vadd.f32 0.0, %v845
  %847 = vmatmul.f32.gmra.mxu0 %v784
  %v848 = vpop.f32.mrf.mxu0
  %v849 = vadd.f32 0.0, %v848
  %850 = vmatmul.f32.gmra.mxu0 %v787
  %v851 = vpop.f32.mrf.mxu0
  %v852 = vadd.f32 0.0, %v851
  %853 = vmatmul.f32.gmra.mxu0 %v790
  %v854 = vpop.f32.mrf.mxu0
  %v855 = vadd.f32 0.0, %v854
  %856 = vmatmul.f32.gmra.mxu0 %v793
  %v857 = vpop.f32.mrf.mxu0
  %v858 = vadd.f32 0.0, %v857
  %859 = vmatmul.f32.gmra.mxu0 %v796
  %v860 = vpop.f32.mrf.mxu0
  %v861 = vadd.f32 0.0, %v860
  %862 = vmatmul.f32.gmra.mxu0 %v799
  %v863 = vpop.f32.mrf.mxu0
  %v864 = vadd.f32 0.0, %v863
  %865 = vmatmul.f32.gmra.mxu0 %v802
  %v866 = vpop.f32.mrf.mxu0
  %v867 = vadd.f32 0.0, %v866
  %868 = vmatmul.f32.gmra.mxu0 %v805
  %v869 = vpop.f32.mrf.mxu0
  %v870 = vadd.f32 0.0, %v869
  %871 = vmatmul.f32.gmra.mxu0 %v808
  %v872 = vpop.f32.mrf.mxu0
  %v873 = vadd.f32 0.0, %v872
  %874 = vdwg.mxu0
  %v876 = vsel %vm761, %v577, 0
  %v879 = vsel %vm761, %v580, 0
  %v882 = vsel %vm761, %v583, 0
  %v885 = vsel %vm761, %v586, 0
  %v888 = vsel %vm761, %v589, 0
  %v891 = vsel %vm761, %v592, 0
  %v894 = vsel %vm761, %v595, 0
  %v897 = vsel %vm761, %v598, 0
  %v900 = vsel %vm761, %v601, 0
  %v903 = vsel %vm761, %v604, 0
  %v906 = vsel %vm761, %v607, 0
  %v909 = vsel %vm761, %v610, 0
  %v912 = vsel %vm761, %v613, 0
  %v915 = vsel %vm761, %v616, 0
  %v918 = vsel %vm761, %v619, 0
  %v921 = vsel %vm761, %v622, 0
  %923 = vmatpush.msra.mxu0 0.0
  %924 = vmatpush.msra.mxu0 0.0
  %925 = vmatpush.msra.mxu0 0.0
  %926 = vmatpush.msra.mxu0 0.0
  %927 = vmatpush.msra.mxu0 0.0
  %928 = vmatpush.msra.mxu0 0.0
  %929 = vmatpush.msra.mxu0 0.0
  %930 = vmatpush.msra.mxu0 0.0
  %931 = vmatpush.msra.mxu0 0.0
  %932 = vmatpush.msra.mxu0 0.0
  %933 = vmatpush.msra.mxu0 0.0
  %934 = vmatpush.msra.mxu0 0.0
  %935 = vmatpush.msra.mxu0 %v627
  %936 = vmatpush.msra.mxu0 %v626
  %937 = vmatpush.msra.mxu0 %v625
  %938 = vmatpush.msra.mxu0 %v624
  %939 = vmatmul.f32.gmra.mxu0 %v876
  %v940 = vpop.f32.mrf.mxu0
  %v941 = vadd.f32 %v828, %v940
  %942 = vmatmul.f32.gmra.mxu0 %v879
  %v943 = vpop.f32.mrf.mxu0
  %v944 = vadd.f32 %v831, %v943
  %945 = vmatmul.f32.gmra.mxu0 %v882
  %v946 = vpop.f32.mrf.mxu0
  %v947 = vadd.f32 %v834, %v946
  %948 = vmatmul.f32.gmra.mxu0 %v885
  %v949 = vpop.f32.mrf.mxu0
  %v950 = vadd.f32 %v837, %v949
  %951 = vmatmul.f32.gmra.mxu0 %v888
  %v952 = vpop.f32.mrf.mxu0
  %v953 = vadd.f32 %v840, %v952
  %954 = vmatmul.f32.gmra.mxu0 %v891
  %v955 = vpop.f32.mrf.mxu0
  %v956 = vadd.f32 %v843, %v955
  %957 = vmatmul.f32.gmra.mxu0 %v894
  %v958 = vpop.f32.mrf.mxu0
  %v959 = vadd.f32 %v846, %v958
  %960 = vmatmul.f32.gmra.mxu0 %v897
  %v961 = vpop.f32.mrf.mxu0
  %v962 = vadd.f32 %v849, %v961
  %963 = vmatmul.f32.gmra.mxu0 %v900
  %v964 = vpop.f32.mrf.mxu0
  %v965 = vadd.f32 %v852, %v964
  %966 = vmatmul.f32.gmra.mxu0 %v903
  %v967 = vpop.f32.mrf.mxu0
  %v968 = vadd.f32 %v855, %v967
  %969 = vmatmul.f32.gmra.mxu0 %v906
  %v970 = vpop.f32.mrf.mxu0
  %v971 = vadd.f32 %v858, %v970
  %972 = vmatmul.f32.gmra.mxu0 %v909
  %v973 = vpop.f32.mrf.mxu0
  %v974 = vadd.f32 %v861, %v973
  %975 = vmatmul.f32.gmra.mxu0 %v912
  %v976 = vpop.f32.mrf.mxu0
  %v977 = vadd.f32 %v864, %v976
  %978 = vmatmul.f32.gmra.mxu0 %v915
  %v979 = vpop.f32.mrf.mxu0
  %v980 = vadd.f32 %v867, %v979
  %981 = vmatmul.f32.gmra.mxu0 %v918
  %v982 = vpop.f32.mrf.mxu0
  %v983 = vadd.f32 %v870, %v982
  %984 = vmatmul.f32.gmra.mxu0 %v921
  %v985 = vpop.f32.mrf.mxu0
  %v986 = vadd.f32 %v873, %v985
  %987 = vdwg.mxu0
  %v988 = vld [vmem:[%s3 + $0x100] sm:$0xff]
  %v989 = vld [vmem:[%s3 + $0x108] sm:$0xff]
  %v990 = vld [vmem:[%s3 + $0x110] sm:$0xff]
  %v991 = vld [vmem:[%s3 + $0x118] sm:$0xff]
  %v992 = vld [vmem:[%s3 + $0x120] sm:$0xff]
  %v993 = vld [vmem:[%s3 + $0x128] sm:$0xff]
  %v994 = vld [vmem:[%s3 + $0x130] sm:$0xff]
  %v995 = vld [vmem:[%s3 + $0x138] sm:$0xff]
  %v996 = vld [vmem:[%s3 + $0x140] sm:$0xff]
  %v997 = vld [vmem:[%s3 + $0x148] sm:$0xff]
  %v998 = vld [vmem:[%s3 + $0x150] sm:$0xff]
  %v999 = vld [vmem:[%s3 + $0x158] sm:$0xff]
  %v1000 = vld [vmem:[%s3 + $0x160] sm:$0xff]
  %v1001 = vld [vmem:[%s3 + $0x168] sm:$0xff]
  %v1002 = vld [vmem:[%s3 + $0x170] sm:$0xff]
  %v1003 = vld [vmem:[%s3 + $0x178] sm:$0xff]
  %v1005 = vsel %vm510, %v988, 0
  %v1008 = vsel %vm510, %v989, 0
  %v1011 = vsel %vm510, %v990, 0
  %v1014 = vsel %vm510, %v991, 0
  %v1017 = vsel %vm510, %v992, 0
  %v1020 = vsel %vm510, %v993, 0
  %v1023 = vsel %vm510, %v994, 0
  %v1026 = vsel %vm510, %v995, 0
  %v1029 = vsel %vm510, %v996, 0
  %v1032 = vsel %vm510, %v997, 0
  %v1035 = vsel %vm510, %v998, 0
  %v1038 = vsel %vm510, %v999, 0
  %v1041 = vsel %vm510, %v1000, 0
  %v1044 = vsel %vm510, %v1001, 0
  %v1047 = vsel %vm510, %v1002, 0
  %v1050 = vsel %vm510, %v1003, 0
  %1052 = vmatpush.msra.mxu0 0.0
  %1053 = vmatpush.msra.mxu0 0.0
  %1054 = vmatpush.msra.mxu0 0.0
  %1055 = vmatpush.msra.mxu0 %v493
  %1056 = vmatpush.msra.mxu0 %v492
  %1057 = vmatpush.msra.mxu0 %v491
  %1058 = vmatpush.msra.mxu0 %v490
  %1059 = vmatpush.msra.mxu0 %v489
  %1060 = vmatpush.msra.mxu0 %v488
  %1061 = vmatpush.msra.mxu0 %v487
  %1062 = vmatpush.msra.mxu0 %v486
  %1063 = vmatpush.msra.mxu0 %v485
  %1064 = vmatpush.msra.mxu0 %v484
  %1065 = vmatpush.msra.mxu0 %v483
  %1066 = vmatpush.msra.mxu0 %v482
  %1067 = vmatpush.msra.mxu0 %v481
  %1068 = vmatmul.f32.gmra.mxu0 %v1005
  %v1069 = vpop.f32.mrf.mxu0
  %v1070 = vadd.f32 0.0, %v1069
  %1071 = vmatmul.f32.gmra.mxu0 %v1008
  %v1072 = vpop.f32.mrf.mxu0
  %v1073 = vadd.f32 0.0, %v1072
  %1074 = vmatmul.f32.gmra.mxu0 %v1011
  %v1075 = vpop.f32.mrf.mxu0
  %v1076 = vadd.f32 0.0, %v1075
  %1077 = vmatmul.f32.gmra.mxu0 %v1014
  %v1078 = vpop.f32.mrf.mxu0
  %v1079 = vadd.f32 0.0, %v1078
  %1080 = vmatmul.f32.gmra.mxu0 %v1017
  %v1081 = vpop.f32.mrf.mxu0
  %v1082 = vadd.f32 0.0, %v1081
  %1083 = vmatmul.f32.gmra.mxu0 %v1020
  %v1084 = vpop.f32.mrf.mxu0
  %v1085 = vadd.f32 0.0, %v1084
  %1086 = vmatmul.f32.gmra.mxu0 %v1023
  %v1087 = vpop.f32.mrf.mxu0
  %v1088 = vadd.f32 0.0, %v1087
  %1089 = vmatmul.f32.gmra.mxu0 %v1026
  %v1090 = vpop.f32.mrf.mxu0
  %v1091 = vadd.f32 0.0, %v1090
  %1092 = vmatmul.f32.gmra.mxu0 %v1029
  %v1093 = vpop.f32.mrf.mxu0
  %v1094 = vadd.f32 0.0, %v1093
  %1095 = vmatmul.f32.gmra.mxu0 %v1032
  %v1096 = vpop.f32.mrf.mxu0
  %v1097 = vadd.f32 0.0, %v1096
  %1098 = vmatmul.f32.gmra.mxu0 %v1035
  %v1099 = vpop.f32.mrf.mxu0
  %v1100 = vadd.f32 0.0, %v1099
  %1101 = vmatmul.f32.gmra.mxu0 %v1038
  %v1102 = vpop.f32.mrf.mxu0
  %v1103 = vadd.f32 0.0, %v1102
  %1104 = vmatmul.f32.gmra.mxu0 %v1041
  %v1105 = vpop.f32.mrf.mxu0
  %v1106 = vadd.f32 0.0, %v1105
  %1107 = vmatmul.f32.gmra.mxu0 %v1044
  %v1108 = vpop.f32.mrf.mxu0
  %v1109 = vadd.f32 0.0, %v1108
  %1110 = vmatmul.f32.gmra.mxu0 %v1047
  %v1111 = vpop.f32.mrf.mxu0
  %v1112 = vadd.f32 0.0, %v1111
  %1113 = vmatmul.f32.gmra.mxu0 %v1050
  %v1114 = vpop.f32.mrf.mxu0
  %v1115 = vadd.f32 0.0, %v1114
  %1116 = vdwg.mxu0
  %v1117 = vld [vmem:[%s4 + $0x40] sm:$0xff]
  %v1118 = vld [vmem:[%s4 + $0x48] sm:$0xff]
  %v1119 = vld [vmem:[%s4 + $0x50] sm:$0xff]
  %v1120 = vld [vmem:[%s4 + $0x58] sm:$0xff]
  %v1122 = vsel %vm761, %v1070, 0
  %v1125 = vsel %vm761, %v1073, 0
  %v1128 = vsel %vm761, %v1076, 0
  %v1131 = vsel %vm761, %v1079, 0
  %v1134 = vsel %vm761, %v1082, 0
  %v1137 = vsel %vm761, %v1085, 0
  %v1140 = vsel %vm761, %v1088, 0
  %v1143 = vsel %vm761, %v1091, 0
  %v1146 = vsel %vm761, %v1094, 0
  %v1149 = vsel %vm761, %v1097, 0
  %v1152 = vsel %vm761, %v1100, 0
  %v1155 = vsel %vm761, %v1103, 0
  %v1158 = vsel %vm761, %v1106, 0
  %v1161 = vsel %vm761, %v1109, 0
  %v1164 = vsel %vm761, %v1112, 0
  %v1167 = vsel %vm761, %v1115, 0
  %1169 = vmatpush.msra.mxu0 0.0
  %1170 = vmatpush.msra.mxu0 0.0
  %1171 = vmatpush.msra.mxu0 0.0
  %1172 = vmatpush.msra.mxu0 0.0
  %1173 = vmatpush.msra.mxu0 0.0
  %1174 = vmatpush.msra.mxu0 0.0
  %1175 = vmatpush.msra.mxu0 0.0
  %1176 = vmatpush.msra.mxu0 0.0
  %1177 = vmatpush.msra.mxu0 0.0
  %1178 = vmatpush.msra.mxu0 0.0
  %1179 = vmatpush.msra.mxu0 0.0
  %1180 = vmatpush.msra.mxu0 0.0
  %1181 = vmatpush.msra.mxu0 %v1120
  %1182 = vmatpush.msra.mxu0 %v1119
  %1183 = vmatpush.msra.mxu0 %v1118
  %1184 = vmatpush.msra.mxu0 %v1117
  %1185 = vmatmul.f32.gmra.mxu0 %v1122
  %v1186 = vpop.f32.mrf.mxu0
  %v1187 = vadd.f32 0.0, %v1186
  %1188 = vmatmul.f32.gmra.mxu0 %v1125
  %v1189 = vpop.f32.mrf.mxu0
  %v1190 = vadd.f32 0.0, %v1189
  %1191 = vmatmul.f32.gmra.mxu0 %v1128
  %v1192 = vpop.f32.mrf.mxu0
  %v1193 = vadd.f32 0.0, %v1192
  %1194 = vmatmul.f32.gmra.mxu0 %v1131
  %v1195 = vpop.f32.mrf.mxu0
  %v1196 = vadd.f32 0.0, %v1195
  %1197 = vmatmul.f32.gmra.mxu0 %v1134
  %v1198 = vpop.f32.mrf.mxu0
  %v1199 = vadd.f32 0.0, %v1198
  %1200 = vmatmul.f32.gmra.mxu0 %v1137
  %v1201 = vpop.f32.mrf.mxu0
  %v1202 = vadd.f32 0.0, %v1201
  %1203 = vmatmul.f32.gmra.mxu0 %v1140
  %v1204 = vpop.f32.mrf.mxu0
  %v1205 = vadd.f32 0.0, %v1204
  %1206 = vmatmul.f32.gmra.mxu0 %v1143
  %v1207 = vpop.f32.mrf.mxu0
  %v1208 = vadd.f32 0.0, %v1207
  %1209 = vmatmul.f32.gmra.mxu0 %v1146
  %v1210 = vpop.f32.mrf.mxu0
  %v1211 = vadd.f32 0.0, %v1210
  %1212 = vmatmul.f32.gmra.mxu0 %v1149
  %v1213 = vpop.f32.mrf.mxu0
  %v1214 = vadd.f32 0.0, %v1213
  %1215 = vmatmul.f32.gmra.mxu0 %v1152
  %v1216 = vpop.f32.mrf.mxu0
  %v1217 = vadd.f32 0.0, %v1216
  %1218 = vmatmul.f32.gmra.mxu0 %v1155
  %v1219 = vpop.f32.mrf.mxu0
  %v1220 = vadd.f32 0.0, %v1219
  %1221 = vmatmul.f32.gmra.mxu0 %v1158
  %v1222 = vpop.f32.mrf.mxu0
  %v1223 = vadd.f32 0.0, %v1222
  %1224 = vmatmul.f32.gmra.mxu0 %v1161
  %v1225 = vpop.f32.mrf.mxu0
  %v1226 = vadd.f32 0.0, %v1225
  %1227 = vmatmul.f32.gmra.mxu0 %v1164
  %v1228 = vpop.f32.mrf.mxu0
  %v1229 = vadd.f32 0.0, %v1228
  %1230 = vmatmul.f32.gmra.mxu0 %v1167
  %v1231 = vpop.f32.mrf.mxu0
  %v1232 = vadd.f32 0.0, %v1231
  %1233 = vdwg.mxu0
  %v1234 = vadd.f32 %v941, %v1187
  %v1235 = vadd.f32 %v944, %v1190
  %v1236 = vadd.f32 %v947, %v1193
  %v1237 = vadd.f32 %v950, %v1196
  %v1238 = vadd.f32 %v953, %v1199
  %v1239 = vadd.f32 %v956, %v1202
  %v1240 = vadd.f32 %v959, %v1205
  %v1241 = vadd.f32 %v962, %v1208
  %v1242 = vadd.f32 %v965, %v1211
  %v1243 = vadd.f32 %v968, %v1214
  %v1244 = vadd.f32 %v971, %v1217
  %v1245 = vadd.f32 %v974, %v1220
  %v1246 = vadd.f32 %v977, %v1223
  %v1247 = vadd.f32 %v980, %v1226
  %v1248 = vadd.f32 %v983, %v1229
  %v1249 = vadd.f32 %v986, %v1232
  %v1250 = vld [vmem:[%s3 + $0x180] sm:$0xff]
  %v1251 = vld [vmem:[%s3 + $0x188] sm:$0xff]
  %v1252 = vld [vmem:[%s3 + $0x190] sm:$0xff]
  %v1253 = vld [vmem:[%s3 + $0x198] sm:$0xff]
  %v1254 = vld [vmem:[%s3 + $0x1a0] sm:$0xff]
  %v1255 = vld [vmem:[%s3 + $0x1a8] sm:$0xff]
  %v1256 = vld [vmem:[%s3 + $0x1b0] sm:$0xff]
  %v1257 = vld [vmem:[%s3 + $0x1b8] sm:$0xff]
  %v1258 = vld [vmem:[%s3 + $0x1c0] sm:$0xff]
  %v1259 = vld [vmem:[%s3 + $0x1c8] sm:$0xff]
  %v1260 = vld [vmem:[%s3 + $0x1d0] sm:$0xff]
  %v1261 = vld [vmem:[%s3 + $0x1d8] sm:$0xff]
  %v1262 = vld [vmem:[%s3 + $0x1e0] sm:$0xff]
  %v1263 = vld [vmem:[%s3 + $0x1e8] sm:$0xff]
  %v1264 = vld [vmem:[%s3 + $0x1f0] sm:$0xff]
  %v1265 = vld [vmem:[%s3 + $0x1f8] sm:$0xff]
  %v1267 = vsel %vm510, %v1250, 0
  %v1270 = vsel %vm510, %v1251, 0
  %v1273 = vsel %vm510, %v1252, 0
  %v1276 = vsel %vm510, %v1253, 0
  %v1279 = vsel %vm510, %v1254, 0
  %v1282 = vsel %vm510, %v1255, 0
  %v1285 = vsel %vm510, %v1256, 0
  %v1288 = vsel %vm510, %v1257, 0
  %v1291 = vsel %vm510, %v1258, 0
  %v1294 = vsel %vm510, %v1259, 0
  %v1297 = vsel %vm510, %v1260, 0
  %v1300 = vsel %vm510, %v1261, 0
  %v1303 = vsel %vm510, %v1262, 0
  %v1306 = vsel %vm510, %v1263, 0
  %v1309 = vsel %vm510, %v1264, 0
  %v1312 = vsel %vm510, %v1265, 0
  %1314 = vmatpush.msra.mxu0 0.0
  %1315 = vmatpush.msra.mxu0 0.0
  %1316 = vmatpush.msra.mxu0 0.0
  %1317 = vmatpush.msra.mxu0 %v493
  %1318 = vmatpush.msra.mxu0 %v492
  %1319 = vmatpush.msra.mxu0 %v491
  %1320 = vmatpush.msra.mxu0 %v490
  %1321 = vmatpush.msra.mxu0 %v489
  %1322 = vmatpush.msra.mxu0 %v488
  %1323 = vmatpush.msra.mxu0 %v487
  %1324 = vmatpush.msra.mxu0 %v486
  %1325 = vmatpush.msra.mxu0 %v485
  %1326 = vmatpush.msra.mxu0 %v484
  %1327 = vmatpush.msra.mxu0 %v483
  %1328 = vmatpush.msra.mxu0 %v482
  %1329 = vmatpush.msra.mxu0 %v481
  %1330 = vmatmul.f32.gmra.mxu0 %v1267
  %v1331 = vpop.f32.mrf.mxu0
  %v1332 = vadd.f32 0.0, %v1331
  %1333 = vmatmul.f32.gmra.mxu0 %v1270
  %v1334 = vpop.f32.mrf.mxu0
  %v1335 = vadd.f32 0.0, %v1334
  %1336 = vmatmul.f32.gmra.mxu0 %v1273
  %v1337 = vpop.f32.mrf.mxu0
  %v1338 = vadd.f32 0.0, %v1337
  %1339 = vmatmul.f32.gmra.mxu0 %v1276
  %v1340 = vpop.f32.mrf.mxu0
  %v1341 = vadd.f32 0.0, %v1340
  %1342 = vmatmul.f32.gmra.mxu0 %v1279
  %v1343 = vpop.f32.mrf.mxu0
  %v1344 = vadd.f32 0.0, %v1343
  %1345 = vmatmul.f32.gmra.mxu0 %v1282
  %v1346 = vpop.f32.mrf.mxu0
  %v1347 = vadd.f32 0.0, %v1346
  %1348 = vmatmul.f32.gmra.mxu0 %v1285
  %v1349 = vpop.f32.mrf.mxu0
  %v1350 = vadd.f32 0.0, %v1349
  %1351 = vmatmul.f32.gmra.mxu0 %v1288
  %v1352 = vpop.f32.mrf.mxu0
  %v1353 = vadd.f32 0.0, %v1352
  %1354 = vmatmul.f32.gmra.mxu0 %v1291
  %v1355 = vpop.f32.mrf.mxu0
  %v1356 = vadd.f32 0.0, %v1355
  %1357 = vmatmul.f32.gmra.mxu0 %v1294
  %v1358 = vpop.f32.mrf.mxu0
  %v1359 = vadd.f32 0.0, %v1358
  %1360 = vmatmul.f32.gmra.mxu0 %v1297
  %v1361 = vpop.f32.mrf.mxu0
  %v1362 = vadd.f32 0.0, %v1361
  %1363 = vmatmul.f32.gmra.mxu0 %v1300
  %v1364 = vpop.f32.mrf.mxu0
  %v1365 = vadd.f32 0.0, %v1364
  %1366 = vmatmul.f32.gmra.mxu0 %v1303
  %v1367 = vpop.f32.mrf.mxu0
  %v1368 = vadd.f32 0.0, %v1367
  %1369 = vmatmul.f32.gmra.mxu0 %v1306
  %v1370 = vpop.f32.mrf.mxu0
  %v1371 = vadd.f32 0.0, %v1370
  %1372 = vmatmul.f32.gmra.mxu0 %v1309
  %v1373 = vpop.f32.mrf.mxu0
  %v1374 = vadd.f32 0.0, %v1373
  %1375 = vmatmul.f32.gmra.mxu0 %v1312
  %v1376 = vpop.f32.mrf.mxu0
  %v1377 = vadd.f32 0.0, %v1376
  %1378 = vdwg.mxu0
  %v1379 = vld [vmem:[%s4 + $0x60] sm:$0xff]
  %v1380 = vld [vmem:[%s4 + $0x68] sm:$0xff]
  %v1381 = vld [vmem:[%s4 + $0x70] sm:$0xff]
  %v1382 = vld [vmem:[%s4 + $0x78] sm:$0xff]
  %v1384 = vsel %vm761, %v1332, 0
  %v1387 = vsel %vm761, %v1335, 0
  %v1390 = vsel %vm761, %v1338, 0
  %v1393 = vsel %vm761, %v1341, 0
  %v1396 = vsel %vm761, %v1344, 0
  %v1399 = vsel %vm761, %v1347, 0
  %v1402 = vsel %vm761, %v1350, 0
  %v1405 = vsel %vm761, %v1353, 0
  %v1408 = vsel %vm761, %v1356, 0
  %v1411 = vsel %vm761, %v1359, 0
  %v1414 = vsel %vm761, %v1362, 0
  %v1417 = vsel %vm761, %v1365, 0
  %v1420 = vsel %vm761, %v1368, 0
  %v1423 = vsel %vm761, %v1371, 0
  %v1426 = vsel %vm761, %v1374, 0
  %v1429 = vsel %vm761, %v1377, 0
  %1431 = vmatpush.msra.mxu0 0.0
  %1432 = vmatpush.msra.mxu0 0.0
  %1433 = vmatpush.msra.mxu0 0.0
  %1434 = vmatpush.msra.mxu0 0.0
  %1435 = vmatpush.msra.mxu0 0.0
  %1436 = vmatpush.msra.mxu0 0.0
  %1437 = vmatpush.msra.mxu0 0.0
  %1438 = vmatpush.msra.mxu0 0.0
  %1439 = vmatpush.msra.mxu0 0.0
  %1440 = vmatpush.msra.mxu0 0.0
  %1441 = vmatpush.msra.mxu0 0.0
  %1442 = vmatpush.msra.mxu0 0.0
  %1443 = vmatpush.msra.mxu0 %v1382
  %1444 = vmatpush.msra.mxu0 %v1381
  %1445 = vmatpush.msra.mxu0 %v1380
  %1446 = vmatpush.msra.mxu0 %v1379
  %1447 = vmatmul.f32.gmra.mxu0 %v1384
  %v1448 = vpop.f32.mrf.mxu0
  %v1449 = vadd.f32 0.0, %v1448
  %1450 = vmatmul.f32.gmra.mxu0 %v1387
  %v1451 = vpop.f32.mrf.mxu0
  %v1452 = vadd.f32 0.0, %v1451
  %1453 = vmatmul.f32.gmra.mxu0 %v1390
  %v1454 = vpop.f32.mrf.mxu0
  %v1455 = vadd.f32 0.0, %v1454
  %1456 = vmatmul.f32.gmra.mxu0 %v1393
  %v1457 = vpop.f32.mrf.mxu0
  %v1458 = vadd.f32 0.0, %v1457
  %1459 = vmatmul.f32.gmra.mxu0 %v1396
  %v1460 = vpop.f32.mrf.mxu0
  %v1461 = vadd.f32 0.0, %v1460
  %1462 = vmatmul.f32.gmra.mxu0 %v1399
  %v1463 = vpop.f32.mrf.mxu0
  %v1464 = vadd.f32 0.0, %v1463
  %1465 = vmatmul.f32.gmra.mxu0 %v1402
  %v1466 = vpop.f32.mrf.mxu0
  %v1467 = vadd.f32 0.0, %v1466
  %1468 = vmatmul.f32.gmra.mxu0 %v1405
  %v1469 = vpop.f32.mrf.mxu0
  %v1470 = vadd.f32 0.0, %v1469
  %1471 = vmatmul.f32.gmra.mxu0 %v1408
  %v1472 = vpop.f32.mrf.mxu0
  %v1473 = vadd.f32 0.0, %v1472
  %1474 = vmatmul.f32.gmra.mxu0 %v1411
  %v1475 = vpop.f32.mrf.mxu0
  %v1476 = vadd.f32 0.0, %v1475
  %1477 = vmatmul.f32.gmra.mxu0 %v1414
  %v1478 = vpop.f32.mrf.mxu0
  %v1479 = vadd.f32 0.0, %v1478
  %1480 = vmatmul.f32.gmra.mxu0 %v1417
  %v1481 = vpop.f32.mrf.mxu0
  %v1482 = vadd.f32 0.0, %v1481
  %1483 = vmatmul.f32.gmra.mxu0 %v1420
  %v1484 = vpop.f32.mrf.mxu0
  %v1485 = vadd.f32 0.0, %v1484
  %1486 = vmatmul.f32.gmra.mxu0 %v1423
  %v1487 = vpop.f32.mrf.mxu0
  %v1488 = vadd.f32 0.0, %v1487
  %1489 = vmatmul.f32.gmra.mxu0 %v1426
  %v1490 = vpop.f32.mrf.mxu0
  %v1491 = vadd.f32 0.0, %v1490
  %1492 = vmatmul.f32.gmra.mxu0 %v1429
  %v1493 = vpop.f32.mrf.mxu0
  %v1494 = vadd.f32 0.0, %v1493
  %1495 = vdwg.mxu0
  %v1496 = vadd.f32 %v1234, %v1449
  %v1497 = vadd.f32 %v1235, %v1452
  %v1498 = vadd.f32 %v1236, %v1455
  %v1499 = vadd.f32 %v1237, %v1458
  %v1500 = vadd.f32 %v1238, %v1461
  %v1501 = vadd.f32 %v1239, %v1464
  %v1502 = vadd.f32 %v1240, %v1467
  %v1503 = vadd.f32 %v1241, %v1470
  %v1504 = vadd.f32 %v1242, %v1473
  %v1505 = vadd.f32 %v1243, %v1476
  %v1506 = vadd.f32 %v1244, %v1479
  %v1507 = vadd.f32 %v1245, %v1482
  %v1508 = vadd.f32 %v1246, %v1485
  %v1509 = vadd.f32 %v1247, %v1488
  %v1510 = vadd.f32 %v1248, %v1491
  %v1511 = vadd.f32 %v1249, %v1494
  %v1512 = vld [vmem:[%s3 + $0x200] sm:$0xff]
  %v1513 = vld [vmem:[%s3 + $0x208] sm:$0xff]
  %v1514 = vld [vmem:[%s3 + $0x210] sm:$0xff]
  %v1515 = vld [vmem:[%s3 + $0x218] sm:$0xff]
  %v1516 = vld [vmem:[%s3 + $0x220] sm:$0xff]
  %v1517 = vld [vmem:[%s3 + $0x228] sm:$0xff]
  %v1518 = vld [vmem:[%s3 + $0x230] sm:$0xff]
  %v1519 = vld [vmem:[%s3 + $0x238] sm:$0xff]
  %v1520 = vld [vmem:[%s3 + $0x240] sm:$0xff]
  %v1521 = vld [vmem:[%s3 + $0x248] sm:$0xff]
  %v1522 = vld [vmem:[%s3 + $0x250] sm:$0xff]
  %v1523 = vld [vmem:[%s3 + $0x258] sm:$0xff]
  %v1524 = vld [vmem:[%s3 + $0x260] sm:$0xff]
  %v1525 = vld [vmem:[%s3 + $0x268] sm:$0xff]
  %v1526 = vld [vmem:[%s3 + $0x270] sm:$0xff]
  %v1527 = vld [vmem:[%s3 + $0x278] sm:$0xff]
  %v1529 = vsel %vm510, %v1512, 0
  %v1532 = vsel %vm510, %v1513, 0
  %v1535 = vsel %vm510, %v1514, 0
  %v1538 = vsel %vm510, %v1515, 0
  %v1541 = vsel %vm510, %v1516, 0
  %v1544 = vsel %vm510, %v1517, 0
  %v1547 = vsel %vm510, %v1518, 0
  %v1550 = vsel %vm510, %v1519, 0
  %v1553 = vsel %vm510, %v1520, 0
  %v1556 = vsel %vm510, %v1521, 0
  %v1559 = vsel %vm510, %v1522, 0
  %v1562 = vsel %vm510, %v1523, 0
  %v1565 = vsel %vm510, %v1524, 0
  %v1568 = vsel %vm510, %v1525, 0
  %v1571 = vsel %vm510, %v1526, 0
  %v1574 = vsel %vm510, %v1527, 0
  %1576 = vmatpush.msra.mxu0 0.0
  %1577 = vmatpush.msra.mxu0 0.0
  %1578 = vmatpush.msra.mxu0 0.0
  %1579 = vmatpush.msra.mxu0 %v493
  %1580 = vmatpush.msra.mxu0 %v492
  %1581 = vmatpush.msra.mxu0 %v491
  %1582 = vmatpush.msra.mxu0 %v490
  %1583 = vmatpush.msra.mxu0 %v489
  %1584 = vmatpush.msra.mxu0 %v488
  %1585 = vmatpush.msra.mxu0 %v487
  %1586 = vmatpush.msra.mxu0 %v486
  %1587 = vmatpush.msra.mxu0 %v485
  %1588 = vmatpush.msra.mxu0 %v484
  %1589 = vmatpush.msra.mxu0 %v483
  %1590 = vmatpush.msra.mxu0 %v482
  %1591 = vmatpush.msra.mxu0 %v481
  %1592 = vmatmul.f32.gmra.mxu0 %v1529
  %v1593 = vpop.f32.mrf.mxu0
  %v1594 = vadd.f32 0.0, %v1593
  %1595 = vmatmul.f32.gmra.mxu0 %v1532
  %v1596 = vpop.f32.mrf.mxu0
  %v1597 = vadd.f32 0.0, %v1596
  %1598 = vmatmul.f32.gmra.mxu0 %v1535
  %v1599 = vpop.f32.mrf.mxu0
  %v1600 = vadd.f32 0.0, %v1599
  %1601 = vmatmul.f32.gmra.mxu0 %v1538
  %v1602 = vpop.f32.mrf.mxu0
  %v1603 = vadd.f32 0.0, %v1602
  %1604 = vmatmul.f32.gmra.mxu0 %v1541
  %v1605 = vpop.f32.mrf.mxu0
  %v1606 = vadd.f32 0.0, %v1605
  %1607 = vmatmul.f32.gmra.mxu0 %v1544
  %v1608 = vpop.f32.mrf.mxu0
  %v1609 = vadd.f32 0.0, %v1608
  %1610 = vmatmul.f32.gmra.mxu0 %v1547
  %v1611 = vpop.f32.mrf.mxu0
  %v1612 = vadd.f32 0.0, %v1611
  %1613 = vmatmul.f32.gmra.mxu0 %v1550
  %v1614 = vpop.f32.mrf.mxu0
  %v1615 = vadd.f32 0.0, %v1614
  %1616 = vmatmul.f32.gmra.mxu0 %v1553
  %v1617 = vpop.f32.mrf.mxu0
  %v1618 = vadd.f32 0.0, %v1617
  %1619 = vmatmul.f32.gmra.mxu0 %v1556
  %v1620 = vpop.f32.mrf.mxu0
  %v1621 = vadd.f32 0.0, %v1620
  %1622 = vmatmul.f32.gmra.mxu0 %v1559
  %v1623 = vpop.f32.mrf.mxu0
  %v1624 = vadd.f32 0.0, %v1623
  %1625 = vmatmul.f32.gmra.mxu0 %v1562
  %v1626 = vpop.f32.mrf.mxu0
  %v1627 = vadd.f32 0.0, %v1626
  %1628 = vmatmul.f32.gmra.mxu0 %v1565
  %v1629 = vpop.f32.mrf.mxu0
  %v1630 = vadd.f32 0.0, %v1629
  %1631 = vmatmul.f32.gmra.mxu0 %v1568
  %v1632 = vpop.f32.mrf.mxu0
  %v1633 = vadd.f32 0.0, %v1632
  %1634 = vmatmul.f32.gmra.mxu0 %v1571
  %v1635 = vpop.f32.mrf.mxu0
  %v1636 = vadd.f32 0.0, %v1635
  %1637 = vmatmul.f32.gmra.mxu0 %v1574
  %v1638 = vpop.f32.mrf.mxu0
  %v1639 = vadd.f32 0.0, %v1638
  %1640 = vdwg.mxu0
  %v1641 = vld [vmem:[%s4 + $0x80] sm:$0xff]
  %v1642 = vld [vmem:[%s4 + $0x88] sm:$0xff]
  %v1643 = vld [vmem:[%s4 + $0x90] sm:$0xff]
  %v1644 = vld [vmem:[%s4 + $0x98] sm:$0xff]
  %v1646 = vsel %vm761, %v1594, 0
  %v1649 = vsel %vm761, %v1597, 0
  %v1652 = vsel %vm761, %v1600, 0
  %v1655 = vsel %vm761, %v1603, 0
  %v1658 = vsel %vm761, %v1606, 0
  %v1661 = vsel %vm761, %v1609, 0
  %v1664 = vsel %vm761, %v1612, 0
  %v1667 = vsel %vm761, %v1615, 0
  %v1670 = vsel %vm761, %v1618, 0
  %v1673 = vsel %vm761, %v1621, 0
  %v1676 = vsel %vm761, %v1624, 0
  %v1679 = vsel %vm761, %v1627, 0
  %v1682 = vsel %vm761, %v1630, 0
  %v1685 = vsel %vm761, %v1633, 0
  %v1688 = vsel %vm761, %v1636, 0
  %v1691 = vsel %vm761, %v1639, 0
  %1693 = vmatpush.msra.mxu0 0.0
  %1694 = vmatpush.msra.mxu0 0.0
  %1695 = vmatpush.msra.mxu0 0.0
  %1696 = vmatpush.msra.mxu0 0.0
  %1697 = vmatpush.msra.mxu0 0.0
  %1698 = vmatpush.msra.mxu0 0.0
  %1699 = vmatpush.msra.mxu0 0.0
  %1700 = vmatpush.msra.mxu0 0.0
  %1701 = vmatpush.msra.mxu0 0.0
  %1702 = vmatpush.msra.mxu0 0.0
  %1703 = vmatpush.msra.mxu0 0.0
  %1704 = vmatpush.msra.mxu0 0.0
  %1705 = vmatpush.msra.mxu0 %v1644
  %1706 = vmatpush.msra.mxu0 %v1643
  %1707 = vmatpush.msra.mxu0 %v1642
  %1708 = vmatpush.msra.mxu0 %v1641
  %1709 = vmatmul.f32.gmra.mxu0 %v1646
  %v1710 = vpop.f32.mrf.mxu0
  %v1711 = vadd.f32 0.0, %v1710
  %1712 = vmatmul.f32.gmra.mxu0 %v1649
  %v1713 = vpop.f32.mrf.mxu0
  %v1714 = vadd.f32 0.0, %v1713
  %1715 = vmatmul.f32.gmra.mxu0 %v1652
  %v1716 = vpop.f32.mrf.mxu0
  %v1717 = vadd.f32 0.0, %v1716
  %1718 = vmatmul.f32.gmra.mxu0 %v1655
  %v1719 = vpop.f32.mrf.mxu0
  %v1720 = vadd.f32 0.0, %v1719
  %1721 = vmatmul.f32.gmra.mxu0 %v1658
  %v1722 = vpop.f32.mrf.mxu0
  %v1723 = vadd.f32 0.0, %v1722
  %1724 = vmatmul.f32.gmra.mxu0 %v1661
  %v1725 = vpop.f32.mrf.mxu0
  %v1726 = vadd.f32 0.0, %v1725
  %1727 = vmatmul.f32.gmra.mxu0 %v1664
  %v1728 = vpop.f32.mrf.mxu0
  %v1729 = vadd.f32 0.0, %v1728
  %1730 = vmatmul.f32.gmra.mxu0 %v1667
  %v1731 = vpop.f32.mrf.mxu0
  %v1732 = vadd.f32 0.0, %v1731
  %1733 = vmatmul.f32.gmra.mxu0 %v1670
  %v1734 = vpop.f32.mrf.mxu0
  %v1735 = vadd.f32 0.0, %v1734
  %1736 = vmatmul.f32.gmra.mxu0 %v1673
  %v1737 = vpop.f32.mrf.mxu0
  %v1738 = vadd.f32 0.0, %v1737
  %1739 = vmatmul.f32.gmra.mxu0 %v1676
  %v1740 = vpop.f32.mrf.mxu0
  %v1741 = vadd.f32 0.0, %v1740
  %1742 = vmatmul.f32.gmra.mxu0 %v1679
  %v1743 = vpop.f32.mrf.mxu0
  %v1744 = vadd.f32 0.0, %v1743
  %1745 = vmatmul.f32.gmra.mxu0 %v1682
  %v1746 = vpop.f32.mrf.mxu0
  %v1747 = vadd.f32 0.0, %v1746
  %1748 = vmatmul.f32.gmra.mxu0 %v1685
  %v1749 = vpop.f32.mrf.mxu0
  %v1750 = vadd.f32 0.0, %v1749
  %1751 = vmatmul.f32.gmra.mxu0 %v1688
  %v1752 = vpop.f32.mrf.mxu0
  %v1753 = vadd.f32 0.0, %v1752
  %1754 = vmatmul.f32.gmra.mxu0 %v1691
  %v1755 = vpop.f32.mrf.mxu0
  %v1756 = vadd.f32 0.0, %v1755
  %1757 = vdwg.mxu0
  %v1758 = vadd.f32 %v1496, %v1711
  %v1759 = vadd.f32 %v1497, %v1714
  %v1760 = vadd.f32 %v1498, %v1717
  %v1761 = vadd.f32 %v1499, %v1720
  %v1762 = vadd.f32 %v1500, %v1723
  %v1763 = vadd.f32 %v1501, %v1726
  %v1764 = vadd.f32 %v1502, %v1729
  %v1765 = vadd.f32 %v1503, %v1732
  %v1766 = vadd.f32 %v1504, %v1735
  %v1767 = vadd.f32 %v1505, %v1738
  %v1768 = vadd.f32 %v1506, %v1741
  %v1769 = vadd.f32 %v1507, %v1744
  %v1770 = vadd.f32 %v1508, %v1747
  %v1771 = vadd.f32 %v1509, %v1750
  %v1772 = vadd.f32 %v1510, %v1753
  %v1773 = vadd.f32 %v1511, %v1756
  %v1774 = vld [vmem:[%s3 + $0x280] sm:$0xff]
  %v1775 = vld [vmem:[%s3 + $0x288] sm:$0xff]
  %v1776 = vld [vmem:[%s3 + $0x290] sm:$0xff]
  %v1777 = vld [vmem:[%s3 + $0x298] sm:$0xff]
  %v1778 = vld [vmem:[%s3 + $0x2a0] sm:$0xff]
  %v1779 = vld [vmem:[%s3 + $0x2a8] sm:$0xff]
  %v1780 = vld [vmem:[%s3 + $0x2b0] sm:$0xff]
  %v1781 = vld [vmem:[%s3 + $0x2b8] sm:$0xff]
  %v1782 = vld [vmem:[%s3 + $0x2c0] sm:$0xff]
  %v1783 = vld [vmem:[%s3 + $0x2c8] sm:$0xff]
  %v1784 = vld [vmem:[%s3 + $0x2d0] sm:$0xff]
  %v1785 = vld [vmem:[%s3 + $0x2d8] sm:$0xff]
  %v1786 = vld [vmem:[%s3 + $0x2e0] sm:$0xff]
  %v1787 = vld [vmem:[%s3 + $0x2e8] sm:$0xff]
  %v1788 = vld [vmem:[%s3 + $0x2f0] sm:$0xff]
  %v1789 = vld [vmem:[%s3 + $0x2f8] sm:$0xff]
  %v1791 = vsel %vm510, %v1774, 0
  %v1794 = vsel %vm510, %v1775, 0
  %v1797 = vsel %vm510, %v1776, 0
  %v1800 = vsel %vm510, %v1777, 0
  %v1803 = vsel %vm510, %v1778, 0
  %v1806 = vsel %vm510, %v1779, 0
  %v1809 = vsel %vm510, %v1780, 0
  %v1812 = vsel %vm510, %v1781, 0
  %v1815 = vsel %vm510, %v1782, 0
  %v1818 = vsel %vm510, %v1783, 0
  %v1821 = vsel %vm510, %v1784, 0
  %v1824 = vsel %vm510, %v1785, 0
  %v1827 = vsel %vm510, %v1786, 0
  %v1830 = vsel %vm510, %v1787, 0
  %v1833 = vsel %vm510, %v1788, 0
  %v1836 = vsel %vm510, %v1789, 0
  %1838 = vmatpush.msra.mxu0 0.0
  %1839 = vmatpush.msra.mxu0 0.0
  %1840 = vmatpush.msra.mxu0 0.0
  %1841 = vmatpush.msra.mxu0 %v493
  %1842 = vmatpush.msra.mxu0 %v492
  %1843 = vmatpush.msra.mxu0 %v491
  %1844 = vmatpush.msra.mxu0 %v490
  %1845 = vmatpush.msra.mxu0 %v489
  %1846 = vmatpush.msra.mxu0 %v488
  %1847 = vmatpush.msra.mxu0 %v487
  %1848 = vmatpush.msra.mxu0 %v486
  %1849 = vmatpush.msra.mxu0 %v485
  %1850 = vmatpush.msra.mxu0 %v484
  %1851 = vmatpush.msra.mxu0 %v483
  %1852 = vmatpush.msra.mxu0 %v482
  %1853 = vmatpush.msra.mxu0 %v481
  %1854 = vmatmul.f32.gmra.mxu0 %v1791
  %v1855 = vpop.f32.mrf.mxu0
  %v1856 = vadd.f32 0.0, %v1855
  %1857 = vmatmul.f32.gmra.mxu0 %v1794
  %v1858 = vpop.f32.mrf.mxu0
  %v1859 = vadd.f32 0.0, %v1858
  %1860 = vmatmul.f32.gmra.mxu0 %v1797
  %v1861 = vpop.f32.mrf.mxu0
  %v1862 = vadd.f32 0.0, %v1861
  %1863 = vmatmul.f32.gmra.mxu0 %v1800
  %v1864 = vpop.f32.mrf.mxu0
  %v1865 = vadd.f32 0.0, %v1864
  %1866 = vmatmul.f32.gmra.mxu0 %v1803
  %v1867 = vpop.f32.mrf.mxu0
  %v1868 = vadd.f32 0.0, %v1867
  %1869 = vmatmul.f32.gmra.mxu0 %v1806
  %v1870 = vpop.f32.mrf.mxu0
  %v1871 = vadd.f32 0.0, %v1870
  %1872 = vmatmul.f32.gmra.mxu0 %v1809
  %v1873 = vpop.f32.mrf.mxu0
  %v1874 = vadd.f32 0.0, %v1873
  %1875 = vmatmul.f32.gmra.mxu0 %v1812
  %v1876 = vpop.f32.mrf.mxu0
  %v1877 = vadd.f32 0.0, %v1876
  %1878 = vmatmul.f32.gmra.mxu0 %v1815
  %v1879 = vpop.f32.mrf.mxu0
  %v1880 = vadd.f32 0.0, %v1879
  %1881 = vmatmul.f32.gmra.mxu0 %v1818
  %v1882 = vpop.f32.mrf.mxu0
  %v1883 = vadd.f32 0.0, %v1882
  %1884 = vmatmul.f32.gmra.mxu0 %v1821
  %v1885 = vpop.f32.mrf.mxu0
  %v1886 = vadd.f32 0.0, %v1885
  %1887 = vmatmul.f32.gmra.mxu0 %v1824
  %v1888 = vpop.f32.mrf.mxu0
  %v1889 = vadd.f32 0.0, %v1888
  %1890 = vmatmul.f32.gmra.mxu0 %v1827
  %v1891 = vpop.f32.mrf.mxu0
  %v1892 = vadd.f32 0.0, %v1891
  %1893 = vmatmul.f32.gmra.mxu0 %v1830
  %v1894 = vpop.f32.mrf.mxu0
  %v1895 = vadd.f32 0.0, %v1894
  %1896 = vmatmul.f32.gmra.mxu0 %v1833
  %v1897 = vpop.f32.mrf.mxu0
  %v1898 = vadd.f32 0.0, %v1897
  %1899 = vmatmul.f32.gmra.mxu0 %v1836
  %v1900 = vpop.f32.mrf.mxu0
  %v1901 = vadd.f32 0.0, %v1900
  %1902 = vdwg.mxu0
  %v1903 = vld [vmem:[%s4 + $0xa0] sm:$0xff]
  %v1904 = vld [vmem:[%s4 + $0xa8] sm:$0xff]
  %v1905 = vld [vmem:[%s4 + $0xb0] sm:$0xff]
  %v1906 = vld [vmem:[%s4 + $0xb8] sm:$0xff]
  %v1908 = vsel %vm761, %v1856, 0
  %v1911 = vsel %vm761, %v1859, 0
  %v1914 = vsel %vm761, %v1862, 0
  %v1917 = vsel %vm761, %v1865, 0
  %v1920 = vsel %vm761, %v1868, 0
  %v1923 = vsel %vm761, %v1871, 0
  %v1926 = vsel %vm761, %v1874, 0
  %v1929 = vsel %vm761, %v1877, 0
  %v1932 = vsel %vm761, %v1880, 0
  %v1935 = vsel %vm761, %v1883, 0
  %v1938 = vsel %vm761, %v1886, 0
  %v1941 = vsel %vm761, %v1889, 0
  %v1944 = vsel %vm761, %v1892, 0
  %v1947 = vsel %vm761, %v1895, 0
  %v1950 = vsel %vm761, %v1898, 0
  %v1953 = vsel %vm761, %v1901, 0
  %1955 = vmatpush.msra.mxu0 0.0
  %1956 = vmatpush.msra.mxu0 0.0
  %1957 = vmatpush.msra.mxu0 0.0
  %1958 = vmatpush.msra.mxu0 0.0
  %1959 = vmatpush.msra.mxu0 0.0
  %1960 = vmatpush.msra.mxu0 0.0
  %1961 = vmatpush.msra.mxu0 0.0
  %1962 = vmatpush.msra.mxu0 0.0
  %1963 = vmatpush.msra.mxu0 0.0
  %1964 = vmatpush.msra.mxu0 0.0
  %1965 = vmatpush.msra.mxu0 0.0
  %1966 = vmatpush.msra.mxu0 0.0
  %1967 = vmatpush.msra.mxu0 %v1906
  %1968 = vmatpush.msra.mxu0 %v1905
  %1969 = vmatpush.msra.mxu0 %v1904
  %1970 = vmatpush.msra.mxu0 %v1903
  %1971 = vmatmul.f32.gmra.mxu0 %v1908
  %v1972 = vpop.f32.mrf.mxu0
  %v1973 = vadd.f32 0.0, %v1972
  %1974 = vmatmul.f32.gmra.mxu0 %v1911
  %v1975 = vpop.f32.mrf.mxu0
  %v1976 = vadd.f32 0.0, %v1975
  %1977 = vmatmul.f32.gmra.mxu0 %v1914
  %v1978 = vpop.f32.mrf.mxu0
  %v1979 = vadd.f32 0.0, %v1978
  %1980 = vmatmul.f32.gmra.mxu0 %v1917
  %v1981 = vpop.f32.mrf.mxu0
  %v1982 = vadd.f32 0.0, %v1981
  %1983 = vmatmul.f32.gmra.mxu0 %v1920
  %v1984 = vpop.f32.mrf.mxu0
  %v1985 = vadd.f32 0.0, %v1984
  %1986 = vmatmul.f32.gmra.mxu0 %v1923
  %v1987 = vpop.f32.mrf.mxu0
  %v1988 = vadd.f32 0.0, %v1987
  %1989 = vmatmul.f32.gmra.mxu0 %v1926
  %v1990 = vpop.f32.mrf.mxu0
  %v1991 = vadd.f32 0.0, %v1990
  %1992 = vmatmul.f32.gmra.mxu0 %v1929
  %v1993 = vpop.f32.mrf.mxu0
  %v1994 = vadd.f32 0.0, %v1993
  %1995 = vmatmul.f32.gmra.mxu0 %v1932
  %v1996 = vpop.f32.mrf.mxu0
  %v1997 = vadd.f32 0.0, %v1996
  %1998 = vmatmul.f32.gmra.mxu0 %v1935
  %v1999 = vpop.f32.mrf.mxu0
  %v2000 = vadd.f32 0.0, %v1999
  %2001 = vmatmul.f32.gmra.mxu0 %v1938
  %v2002 = vpop.f32.mrf.mxu0
  %v2003 = vadd.f32 0.0, %v2002
  %2004 = vmatmul.f32.gmra.mxu0 %v1941
  %v2005 = vpop.f32.mrf.mxu0
  %v2006 = vadd.f32 0.0, %v2005
  %2007 = vmatmul.f32.gmra.mxu0 %v1944
  %v2008 = vpop.f32.mrf.mxu0
  %v2009 = vadd.f32 0.0, %v2008
  %2010 = vmatmul.f32.gmra.mxu0 %v1947
  %v2011 = vpop.f32.mrf.mxu0
  %v2012 = vadd.f32 0.0, %v2011
  %2013 = vmatmul.f32.gmra.mxu0 %v1950
  %v2014 = vpop.f32.mrf.mxu0
  %v2015 = vadd.f32 0.0, %v2014
  %2016 = vmatmul.f32.gmra.mxu0 %v1953
  %v2017 = vpop.f32.mrf.mxu0
  %v2018 = vadd.f32 0.0, %v2017
  %2019 = vdwg.mxu0
  %v2020 = vadd.f32 %v1758, %v1973
  %v2021 = vadd.f32 %v1759, %v1976
  %v2022 = vadd.f32 %v1760, %v1979
  %v2023 = vadd.f32 %v1761, %v1982
  %v2024 = vadd.f32 %v1762, %v1985
  %v2025 = vadd.f32 %v1763, %v1988
  %v2026 = vadd.f32 %v1764, %v1991
  %v2027 = vadd.f32 %v1765, %v1994
  %v2028 = vadd.f32 %v1766, %v1997
  %v2029 = vadd.f32 %v1767, %v2000
  %v2030 = vadd.f32 %v1768, %v2003
  %v2031 = vadd.f32 %v1769, %v2006
  %v2032 = vadd.f32 %v1770, %v2009
  %v2033 = vadd.f32 %v1771, %v2012
  %v2034 = vadd.f32 %v1772, %v2015
  %v2035 = vadd.f32 %v1773, %v2018
  %v2036 = vld [vmem:[%s3 + $0x300] sm:$0xff]
  %v2037 = vld [vmem:[%s3 + $0x308] sm:$0xff]
  %v2038 = vld [vmem:[%s3 + $0x310] sm:$0xff]
  %v2039 = vld [vmem:[%s3 + $0x318] sm:$0xff]
  %v2040 = vld [vmem:[%s3 + $0x320] sm:$0xff]
  %v2041 = vld [vmem:[%s3 + $0x328] sm:$0xff]
  %v2042 = vld [vmem:[%s3 + $0x330] sm:$0xff]
  %v2043 = vld [vmem:[%s3 + $0x338] sm:$0xff]
  %v2044 = vld [vmem:[%s3 + $0x340] sm:$0xff]
  %v2045 = vld [vmem:[%s3 + $0x348] sm:$0xff]
  %v2046 = vld [vmem:[%s3 + $0x350] sm:$0xff]
  %v2047 = vld [vmem:[%s3 + $0x358] sm:$0xff]
  %v2048 = vld [vmem:[%s3 + $0x360] sm:$0xff]
  %v2049 = vld [vmem:[%s3 + $0x368] sm:$0xff]
  %v2050 = vld [vmem:[%s3 + $0x370] sm:$0xff]
  %v2051 = vld [vmem:[%s3 + $0x378] sm:$0xff]
  %v2053 = vsel %vm510, %v2036, 0
  %v2056 = vsel %vm510, %v2037, 0
  %v2059 = vsel %vm510, %v2038, 0
  %v2062 = vsel %vm510, %v2039, 0
  %v2065 = vsel %vm510, %v2040, 0
  %v2068 = vsel %vm510, %v2041, 0
  %v2071 = vsel %vm510, %v2042, 0
  %v2074 = vsel %vm510, %v2043, 0
  %v2077 = vsel %vm510, %v2044, 0
  %v2080 = vsel %vm510, %v2045, 0
  %v2083 = vsel %vm510, %v2046, 0
  %v2086 = vsel %vm510, %v2047, 0
  %v2089 = vsel %vm510, %v2048, 0
  %v2092 = vsel %vm510, %v2049, 0
  %v2095 = vsel %vm510, %v2050, 0
  %v2098 = vsel %vm510, %v2051, 0
  %2100 = vmatpush.msra.mxu0 0.0
  %2101 = vmatpush.msra.mxu0 0.0
  %2102 = vmatpush.msra.mxu0 0.0
  %2103 = vmatpush.msra.mxu0 %v493
  %2104 = vmatpush.msra.mxu0 %v492
  %2105 = vmatpush.msra.mxu0 %v491
  %2106 = vmatpush.msra.mxu0 %v490
  %2107 = vmatpush.msra.mxu0 %v489
  %2108 = vmatpush.msra.mxu0 %v488
  %2109 = vmatpush.msra.mxu0 %v487
  %2110 = vmatpush.msra.mxu0 %v486
  %2111 = vmatpush.msra.mxu0 %v485
  %2112 = vmatpush.msra.mxu0 %v484
  %2113 = vmatpush.msra.mxu0 %v483
  %2114 = vmatpush.msra.mxu0 %v482
  %2115 = vmatpush.msra.mxu0 %v481
  %2116 = vmatmul.f32.gmra.mxu0 %v2053
  %v2117 = vpop.f32.mrf.mxu0
  %v2118 = vadd.f32 0.0, %v2117
  %2119 = vmatmul.f32.gmra.mxu0 %v2056
  %v2120 = vpop.f32.mrf.mxu0
  %v2121 = vadd.f32 0.0, %v2120
  %2122 = vmatmul.f32.gmra.mxu0 %v2059
  %v2123 = vpop.f32.mrf.mxu0
  %v2124 = vadd.f32 0.0, %v2123
  %2125 = vmatmul.f32.gmra.mxu0 %v2062
  %v2126 = vpop.f32.mrf.mxu0
  %v2127 = vadd.f32 0.0, %v2126
  %2128 = vmatmul.f32.gmra.mxu0 %v2065
  %v2129 = vpop.f32.mrf.mxu0
  %v2130 = vadd.f32 0.0, %v2129
  %2131 = vmatmul.f32.gmra.mxu0 %v2068
  %v2132 = vpop.f32.mrf.mxu0
  %v2133 = vadd.f32 0.0, %v2132
  %2134 = vmatmul.f32.gmra.mxu0 %v2071
  %v2135 = vpop.f32.mrf.mxu0
  %v2136 = vadd.f32 0.0, %v2135
  %2137 = vmatmul.f32.gmra.mxu0 %v2074
  %v2138 = vpop.f32.mrf.mxu0
  %v2139 = vadd.f32 0.0, %v2138
  %2140 = vmatmul.f32.gmra.mxu0 %v2077
  %v2141 = vpop.f32.mrf.mxu0
  %v2142 = vadd.f32 0.0, %v2141
  %2143 = vmatmul.f32.gmra.mxu0 %v2080
  %v2144 = vpop.f32.mrf.mxu0
  %v2145 = vadd.f32 0.0, %v2144
  %2146 = vmatmul.f32.gmra.mxu0 %v2083
  %v2147 = vpop.f32.mrf.mxu0
  %v2148 = vadd.f32 0.0, %v2147
  %2149 = vmatmul.f32.gmra.mxu0 %v2086
  %v2150 = vpop.f32.mrf.mxu0
  %v2151 = vadd.f32 0.0, %v2150
  %2152 = vmatmul.f32.gmra.mxu0 %v2089
  %v2153 = vpop.f32.mrf.mxu0
  %v2154 = vadd.f32 0.0, %v2153
  %2155 = vmatmul.f32.gmra.mxu0 %v2092
  %v2156 = vpop.f32.mrf.mxu0
  %v2157 = vadd.f32 0.0, %v2156
  %2158 = vmatmul.f32.gmra.mxu0 %v2095
  %v2159 = vpop.f32.mrf.mxu0
  %v2160 = vadd.f32 0.0, %v2159
  %2161 = vmatmul.f32.gmra.mxu0 %v2098
  %v2162 = vpop.f32.mrf.mxu0
  %v2163 = vadd.f32 0.0, %v2162
  %2164 = vdwg.mxu0
  %v2165 = vld [vmem:[%s4 + $0xc0] sm:$0xff]
  %v2166 = vld [vmem:[%s4 + $0xc8] sm:$0xff]
  %v2167 = vld [vmem:[%s4 + $0xd0] sm:$0xff]
  %v2168 = vld [vmem:[%s4 + $0xd8] sm:$0xff]
  %v2170 = vsel %vm761, %v2118, 0
  %v2173 = vsel %vm761, %v2121, 0
  %v2176 = vsel %vm761, %v2124, 0
  %v2179 = vsel %vm761, %v2127, 0
  %v2182 = vsel %vm761, %v2130, 0
  %v2185 = vsel %vm761, %v2133, 0
  %v2188 = vsel %vm761, %v2136, 0
  %v2191 = vsel %vm761, %v2139, 0
  %v2194 = vsel %vm761, %v2142, 0
  %v2197 = vsel %vm761, %v2145, 0
  %v2200 = vsel %vm761, %v2148, 0
  %v2203 = vsel %vm761, %v2151, 0
  %v2206 = vsel %vm761, %v2154, 0
  %v2209 = vsel %vm761, %v2157, 0
  %v2212 = vsel %vm761, %v2160, 0
  %v2215 = vsel %vm761, %v2163, 0
  %2217 = vmatpush.msra.mxu0 0.0
  %2218 = vmatpush.msra.mxu0 0.0
  %2219 = vmatpush.msra.mxu0 0.0
  %2220 = vmatpush.msra.mxu0 0.0
  %2221 = vmatpush.msra.mxu0 0.0
  %2222 = vmatpush.msra.mxu0 0.0
  %2223 = vmatpush.msra.mxu0 0.0
  %2224 = vmatpush.msra.mxu0 0.0
  %2225 = vmatpush.msra.mxu0 0.0
  %2226 = vmatpush.msra.mxu0 0.0
  %2227 = vmatpush.msra.mxu0 0.0
  %2228 = vmatpush.msra.mxu0 0.0
  %2229 = vmatpush.msra.mxu0 %v2168
  %2230 = vmatpush.msra.mxu0 %v2167
  %2231 = vmatpush.msra.mxu0 %v2166
  %2232 = vmatpush.msra.mxu0 %v2165
  %2233 = vmatmul.f32.gmra.mxu0 %v2170
  %v2234 = vpop.f32.mrf.mxu0
  %v2235 = vadd.f32 0.0, %v2234
  %2236 = vmatmul.f32.gmra.mxu0 %v2173
  %v2237 = vpop.f32.mrf.mxu0
  %v2238 = vadd.f32 0.0, %v2237
  %2239 = vmatmul.f32.gmra.mxu0 %v2176
  %v2240 = vpop.f32.mrf.mxu0
  %v2241 = vadd.f32 0.0, %v2240
  %2242 = vmatmul.f32.gmra.mxu0 %v2179
  %v2243 = vpop.f32.mrf.mxu0
  %v2244 = vadd.f32 0.0, %v2243
  %2245 = vmatmul.f32.gmra.mxu0 %v2182
  %v2246 = vpop.f32.mrf.mxu0
  %v2247 = vadd.f32 0.0, %v2246
  %2248 = vmatmul.f32.gmra.mxu0 %v2185
  %v2249 = vpop.f32.mrf.mxu0
  %v2250 = vadd.f32 0.0, %v2249
  %2251 = vmatmul.f32.gmra.mxu0 %v2188
  %v2252 = vpop.f32.mrf.mxu0
  %v2253 = vadd.f32 0.0, %v2252
  %2254 = vmatmul.f32.gmra.mxu0 %v2191
  %v2255 = vpop.f32.mrf.mxu0
  %v2256 = vadd.f32 0.0, %v2255
  %2257 = vmatmul.f32.gmra.mxu0 %v2194
  %v2258 = vpop.f32.mrf.mxu0
  %v2259 = vadd.f32 0.0, %v2258
  %2260 = vmatmul.f32.gmra.mxu0 %v2197
  %v2261 = vpop.f32.mrf.mxu0
  %v2262 = vadd.f32 0.0, %v2261
  %2263 = vmatmul.f32.gmra.mxu0 %v2200
  %v2264 = vpop.f32.mrf.mxu0
  %v2265 = vadd.f32 0.0, %v2264
  %2266 = vmatmul.f32.gmra.mxu0 %v2203
  %v2267 = vpop.f32.mrf.mxu0
  %v2268 = vadd.f32 0.0, %v2267
  %2269 = vmatmul.f32.gmra.mxu0 %v2206
  %v2270 = vpop.f32.mrf.mxu0
  %v2271 = vadd.f32 0.0, %v2270
  %2272 = vmatmul.f32.gmra.mxu0 %v2209
  %v2273 = vpop.f32.mrf.mxu0
  %v2274 = vadd.f32 0.0, %v2273
  %2275 = vmatmul.f32.gmra.mxu0 %v2212
  %v2276 = vpop.f32.mrf.mxu0
  %v2277 = vadd.f32 0.0, %v2276
  %2278 = vmatmul.f32.gmra.mxu0 %v2215
  %v2279 = vpop.f32.mrf.mxu0
  %v2280 = vadd.f32 0.0, %v2279
  %2281 = vdwg.mxu0
  %v2282 = vadd.f32 %v2020, %v2235
  %v2283 = vadd.f32 %v2021, %v2238
  %v2284 = vadd.f32 %v2022, %v2241
  %v2285 = vadd.f32 %v2023, %v2244
  %v2286 = vadd.f32 %v2024, %v2247
  %v2287 = vadd.f32 %v2025, %v2250
  %v2288 = vadd.f32 %v2026, %v2253
  %v2289 = vadd.f32 %v2027, %v2256
  %v2290 = vadd.f32 %v2028, %v2259
  %v2291 = vadd.f32 %v2029, %v2262
  %v2292 = vadd.f32 %v2030, %v2265
  %v2293 = vadd.f32 %v2031, %v2268
  %v2294 = vadd.f32 %v2032, %v2271
  %v2295 = vadd.f32 %v2033, %v2274
  %v2296 = vadd.f32 %v2034, %v2277
  %v2297 = vadd.f32 %v2035, %v2280
  %v2298 = vld [vmem:[%s3 + $0x380] sm:$0xff]
  %v2299 = vld [vmem:[%s3 + $0x388] sm:$0xff]
  %v2300 = vld [vmem:[%s3 + $0x390] sm:$0xff]
  %v2301 = vld [vmem:[%s3 + $0x398] sm:$0xff]
  %v2302 = vld [vmem:[%s3 + $0x3a0] sm:$0xff]
  %v2303 = vld [vmem:[%s3 + $0x3a8] sm:$0xff]
  %v2304 = vld [vmem:[%s3 + $0x3b0] sm:$0xff]
  %v2305 = vld [vmem:[%s3 + $0x3b8] sm:$0xff]
  %v2306 = vld [vmem:[%s3 + $0x3c0] sm:$0xff]
  %v2307 = vld [vmem:[%s3 + $0x3c8] sm:$0xff]
  %v2308 = vld [vmem:[%s3 + $0x3d0] sm:$0xff]
  %v2309 = vld [vmem:[%s3 + $0x3d8] sm:$0xff]
  %v2310 = vld [vmem:[%s3 + $0x3e0] sm:$0xff]
  %v2311 = vld [vmem:[%s3 + $0x3e8] sm:$0xff]
  %v2312 = vld [vmem:[%s3 + $0x3f0] sm:$0xff]
  %v2313 = vld [vmem:[%s3 + $0x3f8] sm:$0xff]
  %v2315 = vsel %vm510, %v2298, 0
  %v2318 = vsel %vm510, %v2299, 0
  %v2321 = vsel %vm510, %v2300, 0
  %v2324 = vsel %vm510, %v2301, 0
  %v2327 = vsel %vm510, %v2302, 0
  %v2330 = vsel %vm510, %v2303, 0
  %v2333 = vsel %vm510, %v2304, 0
  %v2336 = vsel %vm510, %v2305, 0
  %v2339 = vsel %vm510, %v2306, 0
  %v2342 = vsel %vm510, %v2307, 0
  %v2345 = vsel %vm510, %v2308, 0
  %v2348 = vsel %vm510, %v2309, 0
  %v2351 = vsel %vm510, %v2310, 0
  %v2354 = vsel %vm510, %v2311, 0
  %v2357 = vsel %vm510, %v2312, 0
  %v2360 = vsel %vm510, %v2313, 0
  %2362 = vmatpush.msra.mxu0 0.0
  %2363 = vmatpush.msra.mxu0 0.0
  %2364 = vmatpush.msra.mxu0 0.0
  %2365 = vmatpush.msra.mxu0 %v493
  %2366 = vmatpush.msra.mxu0 %v492
  %2367 = vmatpush.msra.mxu0 %v491
  %2368 = vmatpush.msra.mxu0 %v490
  %2369 = vmatpush.msra.mxu0 %v489
  %2370 = vmatpush.msra.mxu0 %v488
  %2371 = vmatpush.msra.mxu0 %v487
  %2372 = vmatpush.msra.mxu0 %v486
  %2373 = vmatpush.msra.mxu0 %v485
  %2374 = vmatpush.msra.mxu0 %v484
  %2375 = vmatpush.msra.mxu0 %v483
  %2376 = vmatpush.msra.mxu0 %v482
  %2377 = vmatpush.msra.mxu0 %v481
  %2378 = vmatmul.f32.gmra.mxu0 %v2315
  %v2379 = vpop.f32.mrf.mxu0
  %v2380 = vadd.f32 0.0, %v2379
  %2381 = vmatmul.f32.gmra.mxu0 %v2318
  %v2382 = vpop.f32.mrf.mxu0
  %v2383 = vadd.f32 0.0, %v2382
  %2384 = vmatmul.f32.gmra.mxu0 %v2321
  %v2385 = vpop.f32.mrf.mxu0
  %v2386 = vadd.f32 0.0, %v2385
  %2387 = vmatmul.f32.gmra.mxu0 %v2324
  %v2388 = vpop.f32.mrf.mxu0
  %v2389 = vadd.f32 0.0, %v2388
  %2390 = vmatmul.f32.gmra.mxu0 %v2327
  %v2391 = vpop.f32.mrf.mxu0
  %v2392 = vadd.f32 0.0, %v2391
  %2393 = vmatmul.f32.gmra.mxu0 %v2330
  %v2394 = vpop.f32.mrf.mxu0
  %v2395 = vadd.f32 0.0, %v2394
  %2396 = vmatmul.f32.gmra.mxu0 %v2333
  %v2397 = vpop.f32.mrf.mxu0
  %v2398 = vadd.f32 0.0, %v2397
  %2399 = vmatmul.f32.gmra.mxu0 %v2336
  %v2400 = vpop.f32.mrf.mxu0
  %v2401 = vadd.f32 0.0, %v2400
  %2402 = vmatmul.f32.gmra.mxu0 %v2339
  %v2403 = vpop.f32.mrf.mxu0
  %v2404 = vadd.f32 0.0, %v2403
  %2405 = vmatmul.f32.gmra.mxu0 %v2342
  %v2406 = vpop.f32.mrf.mxu0
  %v2407 = vadd.f32 0.0, %v2406
  %2408 = vmatmul.f32.gmra.mxu0 %v2345
  %v2409 = vpop.f32.mrf.mxu0
  %v2410 = vadd.f32 0.0, %v2409
  %2411 = vmatmul.f32.gmra.mxu0 %v2348
  %v2412 = vpop.f32.mrf.mxu0
  %v2413 = vadd.f32 0.0, %v2412
  %2414 = vmatmul.f32.gmra.mxu0 %v2351
  %v2415 = vpop.f32.mrf.mxu0
  %v2416 = vadd.f32 0.0, %v2415
  %2417 = vmatmul.f32.gmra.mxu0 %v2354
  %v2418 = vpop.f32.mrf.mxu0
  %v2419 = vadd.f32 0.0, %v2418
  %2420 = vmatmul.f32.gmra.mxu0 %v2357
  %v2421 = vpop.f32.mrf.mxu0
  %v2422 = vadd.f32 0.0, %v2421
  %2423 = vmatmul.f32.gmra.mxu0 %v2360
  %v2424 = vpop.f32.mrf.mxu0
  %v2425 = vadd.f32 0.0, %v2424
  %2426 = vdwg.mxu0
  %v2427 = vld [vmem:[%s4 + $0xe0] sm:$0xff]
  %v2428 = vld [vmem:[%s4 + $0xe8] sm:$0xff]
  %v2429 = vld [vmem:[%s4 + $0xf0] sm:$0xff]
  %v2430 = vld [vmem:[%s4 + $0xf8] sm:$0xff]
  %v2432 = vsel %vm761, %v2380, 0
  %v2435 = vsel %vm761, %v2383, 0
  %v2438 = vsel %vm761, %v2386, 0
  %v2441 = vsel %vm761, %v2389, 0
  %v2444 = vsel %vm761, %v2392, 0
  %v2447 = vsel %vm761, %v2395, 0
  %v2450 = vsel %vm761, %v2398, 0
  %v2453 = vsel %vm761, %v2401, 0
  %v2456 = vsel %vm761, %v2404, 0
  %v2459 = vsel %vm761, %v2407, 0
  %v2462 = vsel %vm761, %v2410, 0
  %v2465 = vsel %vm761, %v2413, 0
  %v2468 = vsel %vm761, %v2416, 0
  %v2471 = vsel %vm761, %v2419, 0
  %v2474 = vsel %vm761, %v2422, 0
  %v2477 = vsel %vm761, %v2425, 0
  %2479 = vmatpush.msra.mxu0 0.0
  %2480 = vmatpush.msra.mxu0 0.0
  %2481 = vmatpush.msra.mxu0 0.0
  %2482 = vmatpush.msra.mxu0 0.0
  %2483 = vmatpush.msra.mxu0 0.0
  %2484 = vmatpush.msra.mxu0 0.0
  %2485 = vmatpush.msra.mxu0 0.0
  %2486 = vmatpush.msra.mxu0 0.0
  %2487 = vmatpush.msra.mxu0 0.0
  %2488 = vmatpush.msra.mxu0 0.0
  %2489 = vmatpush.msra.mxu0 0.0
  %2490 = vmatpush.msra.mxu0 0.0
  %2491 = vmatpush.msra.mxu0 %v2430
  %2492 = vmatpush.msra.mxu0 %v2429
  %2493 = vmatpush.msra.mxu0 %v2428
  %2494 = vmatpush.msra.mxu0 %v2427
  %2495 = vmatmul.f32.gmra.mxu0 %v2432
  %v2496 = vpop.f32.mrf.mxu0
  %v2497 = vadd.f32 0.0, %v2496
  %2498 = vmatmul.f32.gmra.mxu0 %v2435
  %v2499 = vpop.f32.mrf.mxu0
  %v2500 = vadd.f32 0.0, %v2499
  %2501 = vmatmul.f32.gmra.mxu0 %v2438
  %v2502 = vpop.f32.mrf.mxu0
  %v2503 = vadd.f32 0.0, %v2502
  %2504 = vmatmul.f32.gmra.mxu0 %v2441
  %v2505 = vpop.f32.mrf.mxu0
  %v2506 = vadd.f32 0.0, %v2505
  %2507 = vmatmul.f32.gmra.mxu0 %v2444
  %v2508 = vpop.f32.mrf.mxu0
  %v2509 = vadd.f32 0.0, %v2508
  %2510 = vmatmul.f32.gmra.mxu0 %v2447
  %v2511 = vpop.f32.mrf.mxu0
  %v2512 = vadd.f32 0.0, %v2511
  %2513 = vmatmul.f32.gmra.mxu0 %v2450
  %v2514 = vpop.f32.mrf.mxu0
  %v2515 = vadd.f32 0.0, %v2514
  %2516 = vmatmul.f32.gmra.mxu0 %v2453
  %v2517 = vpop.f32.mrf.mxu0
  %v2518 = vadd.f32 0.0, %v2517
  %2519 = vmatmul.f32.gmra.mxu0 %v2456
  %v2520 = vpop.f32.mrf.mxu0
  %v2521 = vadd.f32 0.0, %v2520
  %2522 = vmatmul.f32.gmra.mxu0 %v2459
  %v2523 = vpop.f32.mrf.mxu0
  %v2524 = vadd.f32 0.0, %v2523
  %2525 = vmatmul.f32.gmra.mxu0 %v2462
  %v2526 = vpop.f32.mrf.mxu0
  %v2527 = vadd.f32 0.0, %v2526
  %2528 = vmatmul.f32.gmra.mxu0 %v2465
  %v2529 = vpop.f32.mrf.mxu0
  %v2530 = vadd.f32 0.0, %v2529
  %2531 = vmatmul.f32.gmra.mxu0 %v2468
  %v2532 = vpop.f32.mrf.mxu0
  %v2533 = vadd.f32 0.0, %v2532
  %2534 = vmatmul.f32.gmra.mxu0 %v2471
  %v2535 = vpop.f32.mrf.mxu0
  %v2536 = vadd.f32 0.0, %v2535
  %2537 = vmatmul.f32.gmra.mxu0 %v2474
  %v2538 = vpop.f32.mrf.mxu0
  %v2539 = vadd.f32 0.0, %v2538
  %2540 = vmatmul.f32.gmra.mxu0 %v2477
  %v2541 = vpop.f32.mrf.mxu0
  %v2542 = vadd.f32 0.0, %v2541
  %2543 = vdwg.mxu0
  %v2544 = vadd.f32 %v2282, %v2497
  %v2545 = vadd.f32 %v2283, %v2500
  %v2546 = vadd.f32 %v2284, %v2503
  %v2547 = vadd.f32 %v2285, %v2506
  %v2548 = vadd.f32 %v2286, %v2509
  %v2549 = vadd.f32 %v2287, %v2512
  %v2550 = vadd.f32 %v2288, %v2515
  %v2551 = vadd.f32 %v2289, %v2518
  %v2552 = vadd.f32 %v2290, %v2521
  %v2553 = vadd.f32 %v2291, %v2524
  %v2554 = vadd.f32 %v2292, %v2527
  %v2555 = vadd.f32 %v2293, %v2530
  %v2556 = vadd.f32 %v2294, %v2533
  %v2557 = vadd.f32 %v2295, %v2536
  %v2558 = vadd.f32 %v2296, %v2539
  %v2559 = vadd.f32 %v2297, %v2542
  %v2560 = vld [vmem:[%s3 + $0x400] sm:$0xff]
  %v2561 = vld [vmem:[%s3 + $0x408] sm:$0xff]
  %v2562 = vld [vmem:[%s3 + $0x410] sm:$0xff]
  %v2563 = vld [vmem:[%s3 + $0x418] sm:$0xff]
  %v2564 = vld [vmem:[%s3 + $0x420] sm:$0xff]
  %v2565 = vld [vmem:[%s3 + $0x428] sm:$0xff]
  %v2566 = vld [vmem:[%s3 + $0x430] sm:$0xff]
  %v2567 = vld [vmem:[%s3 + $0x438] sm:$0xff]
  %v2568 = vld [vmem:[%s3 + $0x440] sm:$0xff]
  %v2569 = vld [vmem:[%s3 + $0x448] sm:$0xff]
  %v2570 = vld [vmem:[%s3 + $0x450] sm:$0xff]
  %v2571 = vld [vmem:[%s3 + $0x458] sm:$0xff]
  %v2572 = vld [vmem:[%s3 + $0x460] sm:$0xff]
  %v2573 = vld [vmem:[%s3 + $0x468] sm:$0xff]
  %v2574 = vld [vmem:[%s3 + $0x470] sm:$0xff]
  %v2575 = vld [vmem:[%s3 + $0x478] sm:$0xff]
  %v2577 = vsel %vm510, %v2560, 0
  %v2580 = vsel %vm510, %v2561, 0
  %v2583 = vsel %vm510, %v2562, 0
  %v2586 = vsel %vm510, %v2563, 0
  %v2589 = vsel %vm510, %v2564, 0
  %v2592 = vsel %vm510, %v2565, 0
  %v2595 = vsel %vm510, %v2566, 0
  %v2598 = vsel %vm510, %v2567, 0
  %v2601 = vsel %vm510, %v2568, 0
  %v2604 = vsel %vm510, %v2569, 0
  %v2607 = vsel %vm510, %v2570, 0
  %v2610 = vsel %vm510, %v2571, 0
  %v2613 = vsel %vm510, %v2572, 0
  %v2616 = vsel %vm510, %v2573, 0
  %v2619 = vsel %vm510, %v2574, 0
  %v2622 = vsel %vm510, %v2575, 0
  %2624 = vmatpush.msra.mxu0 0.0
  %2625 = vmatpush.msra.mxu0 0.0
  %2626 = vmatpush.msra.mxu0 0.0
  %2627 = vmatpush.msra.mxu0 %v493
  %2628 = vmatpush.msra.mxu0 %v492
  %2629 = vmatpush.msra.mxu0 %v491
  %2630 = vmatpush.msra.mxu0 %v490
  %2631 = vmatpush.msra.mxu0 %v489
  %2632 = vmatpush.msra.mxu0 %v488
  %2633 = vmatpush.msra.mxu0 %v487
  %2634 = vmatpush.msra.mxu0 %v486
  %2635 = vmatpush.msra.mxu0 %v485
  %2636 = vmatpush.msra.mxu0 %v484
  %2637 = vmatpush.msra.mxu0 %v483
  %2638 = vmatpush.msra.mxu0 %v482
  %2639 = vmatpush.msra.mxu0 %v481
  %2640 = vmatmul.f32.gmra.mxu0 %v2577
  %v2641 = vpop.f32.mrf.mxu0
  %v2642 = vadd.f32 0.0, %v2641
  %2643 = vmatmul.f32.gmra.mxu0 %v2580
  %v2644 = vpop.f32.mrf.mxu0
  %v2645 = vadd.f32 0.0, %v2644
  %2646 = vmatmul.f32.gmra.mxu0 %v2583
  %v2647 = vpop.f32.mrf.mxu0
  %v2648 = vadd.f32 0.0, %v2647
  %2649 = vmatmul.f32.gmra.mxu0 %v2586
  %v2650 = vpop.f32.mrf.mxu0
  %v2651 = vadd.f32 0.0, %v2650
  %2652 = vmatmul.f32.gmra.mxu0 %v2589
  %v2653 = vpop.f32.mrf.mxu0
  %v2654 = vadd.f32 0.0, %v2653
  %2655 = vmatmul.f32.gmra.mxu0 %v2592
  %v2656 = vpop.f32.mrf.mxu0
  %v2657 = vadd.f32 0.0, %v2656
  %2658 = vmatmul.f32.gmra.mxu0 %v2595
  %v2659 = vpop.f32.mrf.mxu0
  %v2660 = vadd.f32 0.0, %v2659
  %2661 = vmatmul.f32.gmra.mxu0 %v2598
  %v2662 = vpop.f32.mrf.mxu0
  %v2663 = vadd.f32 0.0, %v2662
  %2664 = vmatmul.f32.gmra.mxu0 %v2601
  %v2665 = vpop.f32.mrf.mxu0
  %v2666 = vadd.f32 0.0, %v2665
  %2667 = vmatmul.f32.gmra.mxu0 %v2604
  %v2668 = vpop.f32.mrf.mxu0
  %v2669 = vadd.f32 0.0, %v2668
  %2670 = vmatmul.f32.gmra.mxu0 %v2607
  %v2671 = vpop.f32.mrf.mxu0
  %v2672 = vadd.f32 0.0, %v2671
  %2673 = vmatmul.f32.gmra.mxu0 %v2610
  %v2674 = vpop.f32.mrf.mxu0
  %v2675 = vadd.f32 0.0, %v2674
  %2676 = vmatmul.f32.gmra.mxu0 %v2613
  %v2677 = vpop.f32.mrf.mxu0
  %v2678 = vadd.f32 0.0, %v2677
  %2679 = vmatmul.f32.gmra.mxu0 %v2616
  %v2680 = vpop.f32.mrf.mxu0
  %v2681 = vadd.f32 0.0, %v2680
  %2682 = vmatmul.f32.gmra.mxu0 %v2619
  %v2683 = vpop.f32.mrf.mxu0
  %v2684 = vadd.f32 0.0, %v2683
  %2685 = vmatmul.f32.gmra.mxu0 %v2622
  %v2686 = vpop.f32.mrf.mxu0
  %v2687 = vadd.f32 0.0, %v2686
  %2688 = vdwg.mxu0
  %v2689 = vld [vmem:[%s4 + $0x100] sm:$0xff]
  %v2690 = vld [vmem:[%s4 + $0x108] sm:$0xff]
  %v2691 = vld [vmem:[%s4 + $0x110] sm:$0xff]
  %v2692 = vld [vmem:[%s4 + $0x118] sm:$0xff]
  %v2694 = vsel %vm761, %v2642, 0
  %v2697 = vsel %vm761, %v2645, 0
  %v2700 = vsel %vm761, %v2648, 0
  %v2703 = vsel %vm761, %v2651, 0
  %v2706 = vsel %vm761, %v2654, 0
  %v2709 = vsel %vm761, %v2657, 0
  %v2712 = vsel %vm761, %v2660, 0
  %v2715 = vsel %vm761, %v2663, 0
  %v2718 = vsel %vm761, %v2666, 0
  %v2721 = vsel %vm761, %v2669, 0
  %v2724 = vsel %vm761, %v2672, 0
  %v2727 = vsel %vm761, %v2675, 0
  %v2730 = vsel %vm761, %v2678, 0
  %v2733 = vsel %vm761, %v2681, 0
  %v2736 = vsel %vm761, %v2684, 0
  %v2739 = vsel %vm761, %v2687, 0
  %2741 = vmatpush.msra.mxu0 0.0
  %2742 = vmatpush.msra.mxu0 0.0
  %2743 = vmatpush.msra.mxu0 0.0
  %2744 = vmatpush.msra.mxu0 0.0
  %2745 = vmatpush.msra.mxu0 0.0
  %2746 = vmatpush.msra.mxu0 0.0
  %2747 = vmatpush.msra.mxu0 0.0
  %2748 = vmatpush.msra.mxu0 0.0
  %2749 = vmatpush.msra.mxu0 0.0
  %2750 = vmatpush.msra.mxu0 0.0
  %2751 = vmatpush.msra.mxu0 0.0
  %2752 = vmatpush.msra.mxu0 0.0
  %2753 = vmatpush.msra.mxu0 %v2692
  %2754 = vmatpush.msra.mxu0 %v2691
  %2755 = vmatpush.msra.mxu0 %v2690
  %2756 = vmatpush.msra.mxu0 %v2689
  %2757 = vmatmul.f32.gmra.mxu0 %v2694
  %v2758 = vpop.f32.mrf.mxu0
  %v2759 = vadd.f32 0.0, %v2758
  %2760 = vmatmul.f32.gmra.mxu0 %v2697
  %v2761 = vpop.f32.mrf.mxu0
  %v2762 = vadd.f32 0.0, %v2761
  %2763 = vmatmul.f32.gmra.mxu0 %v2700
  %v2764 = vpop.f32.mrf.mxu0
  %v2765 = vadd.f32 0.0, %v2764
  %2766 = vmatmul.f32.gmra.mxu0 %v2703
  %v2767 = vpop.f32.mrf.mxu0
  %v2768 = vadd.f32 0.0, %v2767
  %2769 = vmatmul.f32.gmra.mxu0 %v2706
  %v2770 = vpop.f32.mrf.mxu0
  %v2771 = vadd.f32 0.0, %v2770
  %2772 = vmatmul.f32.gmra.mxu0 %v2709
  %v2773 = vpop.f32.mrf.mxu0
  %v2774 = vadd.f32 0.0, %v2773
  %2775 = vmatmul.f32.gmra.mxu0 %v2712
  %v2776 = vpop.f32.mrf.mxu0
  %v2777 = vadd.f32 0.0, %v2776
  %2778 = vmatmul.f32.gmra.mxu0 %v2715
  %v2779 = vpop.f32.mrf.mxu0
  %v2780 = vadd.f32 0.0, %v2779
  %2781 = vmatmul.f32.gmra.mxu0 %v2718
  %v2782 = vpop.f32.mrf.mxu0
  %v2783 = vadd.f32 0.0, %v2782
  %2784 = vmatmul.f32.gmra.mxu0 %v2721
  %v2785 = vpop.f32.mrf.mxu0
  %v2786 = vadd.f32 0.0, %v2785
  %2787 = vmatmul.f32.gmra.mxu0 %v2724
  %v2788 = vpop.f32.mrf.mxu0
  %v2789 = vadd.f32 0.0, %v2788
  %2790 = vmatmul.f32.gmra.mxu0 %v2727
  %v2791 = vpop.f32.mrf.mxu0
  %v2792 = vadd.f32 0.0, %v2791
  %2793 = vmatmul.f32.gmra.mxu0 %v2730
  %v2794 = vpop.f32.mrf.mxu0
  %v2795 = vadd.f32 0.0, %v2794
  %2796 = vmatmul.f32.gmra.mxu0 %v2733
  %v2797 = vpop.f32.mrf.mxu0
  %v2798 = vadd.f32 0.0, %v2797
  %2799 = vmatmul.f32.gmra.mxu0 %v2736
  %v2800 = vpop.f32.mrf.mxu0
  %v2801 = vadd.f32 0.0, %v2800
  %2802 = vmatmul.f32.gmra.mxu0 %v2739
  %v2803 = vpop.f32.mrf.mxu0
  %v2804 = vadd.f32 0.0, %v2803
  %2805 = vdwg.mxu0
  %v2806 = vadd.f32 %v2544, %v2759
  %v2807 = vadd.f32 %v2545, %v2762
  %v2808 = vadd.f32 %v2546, %v2765
  %v2809 = vadd.f32 %v2547, %v2768
  %v2810 = vadd.f32 %v2548, %v2771
  %v2811 = vadd.f32 %v2549, %v2774
  %v2812 = vadd.f32 %v2550, %v2777
  %v2813 = vadd.f32 %v2551, %v2780
  %v2814 = vadd.f32 %v2552, %v2783
  %v2815 = vadd.f32 %v2553, %v2786
  %v2816 = vadd.f32 %v2554, %v2789
  %v2817 = vadd.f32 %v2555, %v2792
  %v2818 = vadd.f32 %v2556, %v2795
  %v2819 = vadd.f32 %v2557, %v2798
  %v2820 = vadd.f32 %v2558, %v2801
  %v2821 = vadd.f32 %v2559, %v2804
  %v2822 = vmax.f32 %v2806, %v2810
  %v2823 = vmax.f32 %v2807, %v2811
  %v2824 = vmax.f32 %v2808, %v2812
  %v2825 = vmax.f32 %v2809, %v2813
  %v2826 = vmax.f32 %v2814, %v2818
  %v2827 = vmax.f32 %v2815, %v2819
  %v2828 = vmax.f32 %v2816, %v2820
  %v2829 = vmax.f32 %v2817, %v2821
  %v2830 = vmax.f32 %v2822, %v2826
  %v2831 = vmax.f32 %v2823, %v2827
  %v2832 = vmax.f32 %v2824, %v2828
  %v2833 = vmax.f32 %v2825, %v2829
  %v2834 = vld [vmem:[%s5] sm:$0x1]
  %v2836 = vperm.slane %v2834, 0
  %v2838 = vadd.f32 %v2830, %v2836
  %v2839 = vadd.f32 %v2831, %v2836
  %v2840 = vadd.f32 %v2832, %v2836
  %v2841 = vadd.f32 %v2833, %v2836
  %v2842 = vmax.f32 %v2838, 0.0
  %v2843 = vmax.f32 %v2839, 0.0
  %v2844 = vmax.f32 %v2840, 0.0
  %v2845 = vmax.f32 %v2841, 0.0
  %v2846 = vld [vmem:[%s6] sm:$0xff]
  %v2847 = vld [vmem:[%s6 + $0x8] sm:$0xff]
  %v2848 = vld [vmem:[%s6 + $0x10] sm:$0xff]
  %v2849 = vld [vmem:[%s6 + $0x18] sm:$0xff]
  %v2850 = vld [vmem:[%s6 + $0x20] sm:$0xff]
  %v2851 = vld [vmem:[%s6 + $0x28] sm:$0xff]
  %v2852 = vld [vmem:[%s6 + $0x30] sm:$0xff]
  %v2853 = vld [vmem:[%s6 + $0x38] sm:$0xff]
  %v2854 = vld [vmem:[%s6 + $0x40] sm:$0xff]
  %v2855 = vld [vmem:[%s6 + $0x48] sm:$0xff]
  %v2856 = vld [vmem:[%s6 + $0x50] sm:$0xff]
  %v2857 = vld [vmem:[%s6 + $0x58] sm:$0xff]
  %v2858 = vld [vmem:[%s6 + $0x60] sm:$0xff]
  %v2859 = vld [vmem:[%s6 + $0x68] sm:$0xff]
  %v2860 = vld [vmem:[%s6 + $0x70] sm:$0xff]
  %v2861 = vld [vmem:[%s6 + $0x78] sm:$0xff]
  %vm2862 = vcmask 523264
  %v2864 = vsel %vm2862, %v2843, 0
  %2866 = vmatpush.msra.mxu0 0.0
  %2867 = vmatpush.msra.mxu0 0.0
  %2868 = vmatpush.msra.mxu0 0.0
  %2869 = vmatpush.msra.mxu0 0.0
  %2870 = vmatpush.msra.mxu0 0.0
  %2871 = vmatpush.msra.mxu0 0.0
  %2872 = vmatpush.msra.mxu0 0.0
  %2873 = vmatpush.msra.mxu0 0.0
  %2874 = vmatpush.msra.mxu0 %v2861
  %2875 = vmatpush.msra.mxu0 %v2860
  %2876 = vmatpush.msra.mxu0 %v2859
  %2877 = vmatpush.msra.mxu0 %v2858
  %2878 = vmatpush.msra.mxu0 %v2857
  %2879 = vmatpush.msra.mxu0 %v2856
  %2880 = vmatpush.msra.mxu0 %v2855
  %2881 = vmatpush.msra.mxu0 %v2854
  %2882 = vmatmul.f32.gmra.mxu0 %v2864
  %v2883 = vpop.f32.mrf.mxu0
  %v2884 = vadd.f32 0.0, %v2883
  %2885 = vdwg.mxu0
  %v2887 = vsel %vm2862, %v2842, 0
  %2889 = vmatpush.msra.mxu0 0.0
  %2890 = vmatpush.msra.mxu0 0.0
  %2891 = vmatpush.msra.mxu0 0.0
  %2892 = vmatpush.msra.mxu0 0.0
  %2893 = vmatpush.msra.mxu0 0.0
  %2894 = vmatpush.msra.mxu0 0.0
  %2895 = vmatpush.msra.mxu0 0.0
  %2896 = vmatpush.msra.mxu0 0.0
  %2897 = vmatpush.msra.mxu0 %v2853
  %2898 = vmatpush.msra.mxu0 %v2852
  %2899 = vmatpush.msra.mxu0 %v2851
  %2900 = vmatpush.msra.mxu0 %v2850
  %2901 = vmatpush.msra.mxu0 %v2849
  %2902 = vmatpush.msra.mxu0 %v2848
  %2903 = vmatpush.msra.mxu0 %v2847
  %2904 = vmatpush.msra.mxu0 %v2846
  %2905 = vmatmul.f32.gmra.mxu0 %v2887
  %v2906 = vpop.f32.mrf.mxu0
  %v2907 = vadd.f32 %v2884, %v2906
  %2908 = vdwg.mxu0
  %v2909 = vld [vmem:[%s6 + $0x80] sm:$0xff]
  %v2910 = vld [vmem:[%s6 + $0x88] sm:$0xff]
  %v2911 = vld [vmem:[%s6 + $0x90] sm:$0xff]
  %v2912 = vld [vmem:[%s6 + $0x98] sm:$0xff]
  %v2913 = vld [vmem:[%s6 + $0xa0] sm:$0xff]
  %v2914 = vld [vmem:[%s6 + $0xa8] sm:$0xff]
  %v2915 = vld [vmem:[%s6 + $0xb0] sm:$0xff]
  %v2916 = vld [vmem:[%s6 + $0xb8] sm:$0xff]
  %v2918 = vsel %vm2862, %v2844, 0
  %2920 = vmatpush.msra.mxu0 0.0
  %2921 = vmatpush.msra.mxu0 0.0
  %2922 = vmatpush.msra.mxu0 0.0
  %2923 = vmatpush.msra.mxu0 0.0
  %2924 = vmatpush.msra.mxu0 0.0
  %2925 = vmatpush.msra.mxu0 0.0
  %2926 = vmatpush.msra.mxu0 0.0
  %2927 = vmatpush.msra.mxu0 0.0
  %2928 = vmatpush.msra.mxu0 %v2916
  %2929 = vmatpush.msra.mxu0 %v2915
  %2930 = vmatpush.msra.mxu0 %v2914
  %2931 = vmatpush.msra.mxu0 %v2913
  %2932 = vmatpush.msra.mxu0 %v2912
  %2933 = vmatpush.msra.mxu0 %v2911
  %2934 = vmatpush.msra.mxu0 %v2910
  %2935 = vmatpush.msra.mxu0 %v2909
  %2936 = vmatmul.f32.gmra.mxu0 %v2918
  %v2937 = vpop.f32.mrf.mxu0
  %v2938 = vadd.f32 0.0, %v2937
  %2939 = vdwg.mxu0
  %v2940 = vadd.f32 %v2907, %v2938
  %v2941 = vld [vmem:[%s6 + $0xc0] sm:$0xff]
  %v2942 = vld [vmem:[%s6 + $0xc8] sm:$0xff]
  %v2943 = vld [vmem:[%s6 + $0xd0] sm:$0xff]
  %v2944 = vld [vmem:[%s6 + $0xd8] sm:$0xff]
  %v2945 = vld [vmem:[%s6 + $0xe0] sm:$0xff]
  %v2946 = vld [vmem:[%s6 + $0xe8] sm:$0xff]
  %v2947 = vld [vmem:[%s6 + $0xf0] sm:$0xff]
  %v2948 = vld [vmem:[%s6 + $0xf8] sm:$0xff]
  %v2950 = vsel %vm2862, %v2845, 0
  %2952 = vmatpush.msra.mxu0 0.0
  %2953 = vmatpush.msra.mxu0 0.0
  %2954 = vmatpush.msra.mxu0 0.0
  %2955 = vmatpush.msra.mxu0 0.0
  %2956 = vmatpush.msra.mxu0 0.0
  %2957 = vmatpush.msra.mxu0 0.0
  %2958 = vmatpush.msra.mxu0 0.0
  %2959 = vmatpush.msra.mxu0 0.0
  %2960 = vmatpush.msra.mxu0 %v2948
  %2961 = vmatpush.msra.mxu0 %v2947
  %2962 = vmatpush.msra.mxu0 %v2946
  %2963 = vmatpush.msra.mxu0 %v2945
  %2964 = vmatpush.msra.mxu0 %v2944
  %2965 = vmatpush.msra.mxu0 %v2943
  %2966 = vmatpush.msra.mxu0 %v2942
  %2967 = vmatpush.msra.mxu0 %v2941
  %2968 = vmatmul.f32.gmra.mxu0 %v2950
  %v2969 = vpop.f32.mrf.mxu0
  %v2970 = vadd.f32 0.0, %v2969
  %2971 = vdwg.mxu0
  %v2972 = vadd.f32 %v2940, %v2970
  %v2973 = vld [vmem:[%s7] sm:$0x1]
  %v2975 = vperm.slane %v2973, 0
  %v2977 = vadd.f32 %v2972, %v2975
  %v2978 = vmax.f32 %v2977, 0.0
  %v2979 = vld [vmem:[%s8] sm:$0xff]
  %v2980 = vld [vmem:[%s8 + $0x8] sm:$0xff]
  %v2981 = vld [vmem:[%s8 + $0x10] sm:$0xff]
  %v2982 = vld [vmem:[%s8 + $0x18] sm:$0xff]
  %v2983 = vld [vmem:[%s8 + $0x20] sm:$0xff]
  %v2984 = vld [vmem:[%s8 + $0x28] sm:$0xff]
  %v2985 = vld [vmem:[%s8 + $0x30] sm:$0xff]
  %v2986 = vld [vmem:[%s8 + $0x38] sm:$0xff]
  %v2987 = vld [vmem:[%s9] sm:$0x1]
  %v2989 = vperm.slane %v2987, 0
  %v2992 = vsel %vm2862, %v2978, 0
  %2994 = vmatpush.msra.mxu0 0.0
  %2995 = vmatpush.msra.mxu0 0.0
  %2996 = vmatpush.msra.mxu0 0.0
  %2997 = vmatpush.msra.mxu0 0.0
  %2998 = vmatpush.msra.mxu0 0.0
  %2999 = vmatpush.msra.mxu0 0.0
  %3000 = vmatpush.msra.mxu0 0.0
  %3001 = vmatpush.msra.mxu0 0.0
  %3002 = vmatpush.msra.mxu0 %v2986
  %3003 = vmatpush.msra.mxu0 %v2985
  %3004 = vmatpush.msra.mxu0 %v2984
  %3005 = vmatpush.msra.mxu0 %v2983
  %3006 = vmatpush.msra.mxu0 %v2982
  %3007 = vmatpush.msra.mxu0 %v2981
  %3008 = vmatpush.msra.mxu0 %v2980
  %3009 = vmatpush.msra.mxu0 %v2979
  %3010 = vmatmul.f32.gmra.mxu0 %v2992
  %v3011 = vpop.f32.mrf.mxu0
  %v3012 = vadd.f32 %v2989, %v3011
  %3013 = vdwg.mxu0
  %v3014 = vmax.f32 %v3012, 0.0
  %v3015 = vld [vmem:[%s10] sm:$0xff]
  %v3016 = vld [vmem:[%s10 + $0x8] sm:$0xff]
  %v3017 = vld [vmem:[%s10 + $0x10] sm:$0xff]
  %v3018 = vld [vmem:[%s10 + $0x18] sm:$0xff]
  %v3019 = vld [vmem:[%s11] sm:$0x1]
  %v3021 = vperm.slane %v3019, 0
  %v3024 = vsel %vm761, %v3014, 0
  %3026 = vmatpush.msra.mxu0 0.0
  %3027 = vmatpush.msra.mxu0 0.0
  %3028 = vmatpush.msra.mxu0 0.0
  %3029 = vmatpush.msra.mxu0 0.0
  %3030 = vmatpush.msra.mxu0 0.0
  %3031 = vmatpush.msra.mxu0 0.0
  %3032 = vmatpush.msra.mxu0 0.0
  %3033 = vmatpush.msra.mxu0 0.0
  %3034 = vmatpush.msra.mxu0 0.0
  %3035 = vmatpush.msra.mxu0 0.0
  %3036 = vmatpush.msra.mxu0 0.0
  %3037 = vmatpush.msra.mxu0 0.0
  %3038 = vmatpush.msra.mxu0 %v3018
  %3039 = vmatpush.msra.mxu0 %v3017
  %3040 = vmatpush.msra.mxu0 %v3016
  %3041 = vmatpush.msra.mxu0 %v3015
  %3042 = vmatmul.f32.gmra.mxu0 %v3024
  %v3043 = vpop.f32.mrf.mxu0
  %v3044 = vadd.f32 %v3021, %v3043
  %3045 = vdwg.mxu0
  %3046 = vst [vmem:[%s12] sm:$0xff] %v3044
  // Predicated region
  $region50: #{lenet_forward_pallas.1} parent=0 // pred_check
    _
  $region51: #{lenet_forward_pallas.1} parent=0 // pred_check_branch
    %3048 = sbr.rel (0) target = $region53
  $region52: #{lenet_forward_pallas.1} parent=0 // pred_region
    _
  $region53: #{lenet_forward_pallas.1} parent=0 // pred_fallthru
    _
  // Predicated region
  $region54: #{lenet_forward_pallas.1} parent=0 // pred_check
    _
  $region55: #{lenet_forward_pallas.1} parent=0 // pred_check_branch
    %3050 = sbr.rel (0) target = $region57
  $region56: #{lenet_forward_pallas.1} parent=0 // pred_region
    _
  $region57: #{lenet_forward_pallas.1} parent=0 // pred_fallthru
    _

</llo_original>
